<compile_context>
chip_gen: v5e
topology: v5e:2x2
jax: 0.10.0
libtpu: 0.0.40
codegen_flags: <defaults>
</compile_context>

<pallas_src>
import jax
import jax.numpy as jnp
from jax.experimental import pallas as pl
from jax.experimental.pallas import tpu as pltpu


# --------------------------------- kernel -----------------------------------

def _make_kernel(H, W):
    HW = H * W
    TAPS = [(dy, dx) for dy in (-1, 0, 1) for dx in (-1, 0, 1)]

    def kernel(x0_ref, x1_ref, x2_ref, mask_ref,
               dw1_ref, db1_ref, dw2_ref, db2_ref,
               rw1_ref, rb1_ref, rw2_ref, rb2_ref,
               catw_ref, catb_ref,
               mw1_ref, mw2_ref,
               out_ref):
        f32 = jnp.float32
        tap_masks = mask_ref[...]            # (9, HW) {0,1} f32, loaded once

        def lrelu(x):
            return jnp.where(x > 0, x, 0.2 * x)

        def im2col(x):
            # x: (Cin, HW) spatial-on-lanes -> (9*Cin, HW), tap-major/ch-minor
            pieces = []
            for t, (dy, dx) in enumerate(TAPS):
                s = dy * W + dx                       # flat source offset
                shifted = x if s == 0 else pltpu.roll(x, (-s) % HW, 1)
                if not (dy == 0 and dx == 0):         # center mask == ones
                    shifted = shifted * tap_masks[t:t + 1, :]
                pieces.append(shifted)
            return jnp.concatenate(pieces, axis=0)

        def conv3x3(x, wf, b=None):
            # wf: (Cout, 9*Cin) -> single MXU dot with K = 9*Cin, N = HW
            y = jnp.dot(wf, im2col(x), preferred_element_type=f32)
            return y if b is None else y + b          # b: (Cout, 1)

        x0 = x0_ref[...]                              # (C, HW)
        x1 = x1_ref[...]
        x2 = x2_ref[...]

        # DegradedModel / RefModel: conv3x3 -> LeakyReLU(0.2) -> conv3x3
        degraded = conv3x3(lrelu(conv3x3(x0, dw1_ref[...], db1_ref[...])),
                           dw2_ref[...], db2_ref[...])
        ref_f = conv3x3(lrelu(conv3x3(x1, rw1_ref[...], rb1_ref[...])),
                        rw2_ref[...], rb2_ref[...])

        # Three 1x1 "Concat" convs fused via a block-diagonal weight.  Rows of
        # the result are already [DownMask; DownDegraded; DownRef].
        xcat = jnp.concatenate([x2, degraded, ref_f], axis=0)        # (3C, HW)
        cat = jnp.dot(catw_ref[...], xcat,
                      preferred_element_type=f32) + catb_ref[...]    # (3*Ch, HW)

        # MaskModel: conv3x3 -> LeakyReLU(0.2) -> conv3x3 (no bias)
        mask_f = conv3x3(lrelu(conv3x3(cat, mw1_ref[...])), mw2_ref[...])

        fused = degraded + (ref_f - degraded) * mask_f
        out_ref[...] = fused.astype(out_ref.dtype)

    return kernel


# --------------------------------- glue -------------------------------------

def _flatten_w3(w):
    """OIHW (Cout, Cin, 3, 3) -> (Cout, 9*Cin), (kh, kw, ci) flattening."""
    cout, cin = w.shape[0], w.shape[1]
    return jnp.transpose(w, (0, 2, 3, 1)).reshape(cout, 9 * cin)


def _block_diag(mats):
    rows = sum(m.shape[0] for m in mats)
    cols = sum(m.shape[1] for m in mats)
    out = jnp.zeros((rows, cols), mats[0].dtype)
    r = c = 0
    for m in mats:
        out = out.at[r:r + m.shape[0], c:c + m.shape[1]].set(m)
        r += m.shape[0]
        c += m.shape[1]
    return out


def _tap_masks(H, W):
    """(9, H*W) {0,1} masks: valid source pixel for each 3x3 tap (zero-pad)."""
    i = jnp.arange(H * W)
    row, col = i // W, i % W
    masks = []
    for dy in (-1, 0, 1):
        for dx in (-1, 0, 1):
            ok = ((row + dy >= 0) & (row + dy < H) &
                  (col + dx >= 0) & (col + dx < W))
            masks.append(ok.astype(jnp.float32))
    return jnp.stack(masks, axis=0)


def feature_fusion(x0, x1, x2, params):
    """x0, x1, x2: (B, C, H, W) float32 (NCHW, torch layout)."""
    B, C, H, W = x0.shape
    Ch = C // 2
    HW = H * W

    xf0 = x0.reshape(B, C, HW)
    xf1 = x1.reshape(B, C, HW)
    xf2 = x2.reshape(B, C, HW)
    masks = _tap_masks(H, W)

    cat_w = _block_diag([params["mcat_w"], params["dcat_w"], params["rcat_w"]])
    cat_b = jnp.concatenate(
        [params["mcat_b"], params["dcat_b"], params["rcat_b"]],
        axis=0).reshape(3 * Ch, 1)

    param_list = [
        _flatten_w3(params["dw1"]), params["db1"].reshape(C, 1),
        _flatten_w3(params["dw2"]), params["db2"].reshape(C, 1),
        _flatten_w3(params["rw1"]), params["rb1"].reshape(C, 1),
        _flatten_w3(params["rw2"]), params["rb2"].reshape(C, 1),
        cat_w, cat_b,
        _flatten_w3(params["mw1"]), _flatten_w3(params["mw2"]),
    ]

    x_spec = pl.BlockSpec((None, C, HW), lambda b: (b, 0, 0))
    in_specs = [x_spec, x_spec, x_spec,
                pl.BlockSpec(masks.shape, lambda b: (0, 0))] + [
        pl.BlockSpec(p.shape, lambda b, _n=p.ndim: (0,) * _n)
        for p in param_list
    ]
    out_spec = pl.BlockSpec((None, C, HW), lambda b: (b, 0, 0))

    out = pl.pallas_call(
        _make_kernel(H, W),
        out_shape=jax.ShapeDtypeStruct((B, C, HW), x0.dtype),
        grid_spec=pltpu.PrefetchScalarGridSpec(
            num_scalar_prefetch=0,
            grid=(B,),
            in_specs=in_specs,
            out_specs=out_spec,
        ),
        compiler_params=pltpu.CompilerParams(
            dimension_semantics=("parallel",)),
    )(xf0, xf1, xf2, masks, *param_list)

    return out.reshape(B, C, H, W)


# ---------------------------- parameter setup --------------------------------

def _spectral_normalize(w):
    # torch spectral_norm views the weight as (out_channels, -1)
    m = w.reshape(w.shape[0], -1)
    sigma = jnp.linalg.svd(m, compute_uv=False)[0]
    return w / sigma


def init_params(key, C):
    Ch = C // 2
    ks = jax.random.split(key, 16)

    def w3(k, cout, cin):
        return jax.random.normal(k, (cout, cin, 3, 3), jnp.float32) * 0.1

    def w1(k, cout, cin):
        return jax.random.normal(k, (cout, cin), jnp.float32) * 0.1

    def bias(k, c):
        return jax.random.normal(k, (c,), jnp.float32) * 0.1

    sn = _spectral_normalize
    return {
        "dw1": sn(w3(ks[0], C, C)),  "db1": bias(ks[1], C),
        "dw2": sn(w3(ks[2], C, C)),  "db2": bias(ks[3], C),
        "rw1": sn(w3(ks[4], C, C)),  "rb1": bias(ks[5], C),
        "rw2": sn(w3(ks[6], C, C)),  "rb2": bias(ks[7], C),
        "mcat_w": sn(w1(ks[8], Ch, C)),  "mcat_b": bias(ks[9], Ch),
        "dcat_w": sn(w1(ks[10], Ch, C)), "dcat_b": bias(ks[11], Ch),
        "rcat_w": sn(w1(ks[12], Ch, C)), "rcat_b": bias(ks[13], Ch),
        "mw1": sn(w3(ks[14], C, 3 * Ch)),
        "mw2": sn(w3(ks[15], C, C)),
    }


# --------------------------- pure-JAX reference ------------------------------

def reference_forward(x0, x1, x2, p):
    lrelu = lambda x: jnp.where(x > 0, x, 0.2 * x)
    HI = jax.lax.Precision.HIGHEST

    def c3(x, w, b=None):
        y = jax.lax.conv_general_dilated(
            x, w, (1, 1), [(1, 1), (1, 1)],
            dimension_numbers=("NCHW", "OIHW", "NCHW"), precision=HI)
        return y if b is None else y + b.reshape(1, -1, 1, 1)

    def c1(x, w, b):
        y = jax.lax.conv_general_dilated(
            x, w.reshape(*w.shape, 1, 1), (1, 1), [(0, 0), (0, 0)],
            dimension_numbers=("NCHW", "OIHW", "NCHW"), precision=HI)
        return y + b.reshape(1, -1, 1, 1)

    degraded = c3(lrelu(c3(x0, p["dw1"], p["db1"])), p["dw2"], p["db2"])
    ref_f = c3(lrelu(c3(x1, p["rw1"], p["rb1"])), p["rw2"], p["rb2"])
    dm = c1(x2, p["mcat_w"], p["mcat_b"])
    dd = c1(degraded, p["dcat_w"], p["dcat_b"])
    dr = c1(ref_f, p["rcat_w"], p["rcat_b"])
    cat = jnp.concatenate([dm, dd, dr], axis=1)
    mask = c3(lrelu(c3(cat, p["mw1"])), p["mw2"])
    return degraded + (ref_f - degraded) * mask


# --------------------------------- main --------------------------------------

if __name__ == "__main__":
    B, C, H, W = 2, 4, 16, 16   # matches torch input NCHW (2, 4, 16, 16)
    key = jax.random.PRNGKey(0)
    k0, k1, k2, kp = jax.random.split(key, 4)

    x0 = jax.random.normal(k0, (B, C, H, W), jnp.float32)  # degraded features
    x1 = jax.random.normal(k1, (B, C, H, W), jnp.float32)  # reference features
    x2 = jax.random.normal(k2, (B, C, H, W), jnp.float32)  # mask features

    params = init_params(kp, C)

    out = jax.block_until_ready(feature_fusion(x0, x1, x2, params))

    ref = reference_forward(x0, x1, x2, params)
    assert out.shape == (B, C, H, W)
    max_err = float(jnp.max(jnp.abs(out - ref)))
    assert max_err < 2e-4, f"max abs error vs reference: {max_err}"

    print("KERNEL_OK")
</pallas_src>

<mosaic_0001>
module attributes {stable_mosaic.version = 11 : i64} {
  func.func @kernel(%arg0: i32, %arg1: memref<1x4x256xf32, #tpu.memory_space<vmem>>, %arg2: memref<1x4x256xf32, #tpu.memory_space<vmem>>, %arg3: memref<1x4x256xf32, #tpu.memory_space<vmem>>, %arg4: memref<9x256xf32, #tpu.memory_space<vmem>>, %arg5: memref<4x36xf32, #tpu.memory_space<vmem>>, %arg6: memref<4x1xf32, #tpu.memory_space<vmem>>, %arg7: memref<4x36xf32, #tpu.memory_space<vmem>>, %arg8: memref<4x1xf32, #tpu.memory_space<vmem>>, %arg9: memref<4x36xf32, #tpu.memory_space<vmem>>, %arg10: memref<4x1xf32, #tpu.memory_space<vmem>>, %arg11: memref<4x36xf32, #tpu.memory_space<vmem>>, %arg12: memref<4x1xf32, #tpu.memory_space<vmem>>, %arg13: memref<6x12xf32, #tpu.memory_space<vmem>>, %arg14: memref<6x1xf32, #tpu.memory_space<vmem>>, %arg15: memref<4x54xf32, #tpu.memory_space<vmem>>, %arg16: memref<4x36xf32, #tpu.memory_space<vmem>>, %arg17: memref<1x4x256xf32, #tpu.memory_space<vmem>>) attributes {dimension_semantics = [#tpu.dimension_semantics<parallel>], iteration_bounds = array<i64: 2>, scalar_prefetch = 0 : i64, scratch_operands = 0 : i64, tpu.core_type = #tpu.core_type<tc>, window_params = [{transform_indices = @transform_0, window_bounds = array<i64: 1, 4, 256>}, {transform_indices = @transform_1, window_bounds = array<i64: 1, 4, 256>}, {transform_indices = @transform_2, window_bounds = array<i64: 1, 4, 256>}, {pipeline_mode = #tpu.pipeline_mode<synchronous>, transform_indices = @transform_3, window_bounds = array<i64: 9, 256>}, {pipeline_mode = #tpu.pipeline_mode<synchronous>, transform_indices = @transform_4, window_bounds = array<i64: 4, 36>}, {pipeline_mode = #tpu.pipeline_mode<synchronous>, transform_indices = @transform_5, window_bounds = array<i64: 4, 1>}, {pipeline_mode = #tpu.pipeline_mode<synchronous>, transform_indices = @transform_6, window_bounds = array<i64: 4, 36>}, {pipeline_mode = #tpu.pipeline_mode<synchronous>, transform_indices = @transform_7, window_bounds = array<i64: 4, 1>}, {pipeline_mode = #tpu.pipeline_mode<synchronous>, transform_indices = @transform_8, window_bounds = array<i64: 4, 36>}, {pipeline_mode = #tpu.pipeline_mode<synchronous>, transform_indices = @transform_9, window_bounds = array<i64: 4, 1>}, {pipeline_mode = #tpu.pipeline_mode<synchronous>, transform_indices = @transform_10, window_bounds = array<i64: 4, 36>}, {pipeline_mode = #tpu.pipeline_mode<synchronous>, transform_indices = @transform_11, window_bounds = array<i64: 4, 1>}, {pipeline_mode = #tpu.pipeline_mode<synchronous>, transform_indices = @transform_12, window_bounds = array<i64: 6, 12>}, {pipeline_mode = #tpu.pipeline_mode<synchronous>, transform_indices = @transform_13, window_bounds = array<i64: 6, 1>}, {pipeline_mode = #tpu.pipeline_mode<synchronous>, transform_indices = @transform_14, window_bounds = array<i64: 4, 54>}, {pipeline_mode = #tpu.pipeline_mode<synchronous>, transform_indices = @transform_15, window_bounds = array<i64: 4, 36>}, {transform_indices = @transform_16, window_bounds = array<i64: 1, 4, 256>}]} {
    %c0 = arith.constant 0 : index
    %c0_0 = arith.constant 0 : index
    %0 = vector.load %arg4[%c0, %c0_0] : memref<9x256xf32, #tpu.memory_space<vmem>>, vector<9x256xf32>
    %c0_1 = arith.constant 0 : index
    %c0_2 = arith.constant 0 : index
    %c0_3 = arith.constant 0 : index
    %1 = vector.load %arg1[%c0_1, %c0_2, %c0_3] : memref<1x4x256xf32, #tpu.memory_space<vmem>>, vector<1x4x256xf32>
    %2 = vector.shape_cast %1 : vector<1x4x256xf32> to vector<4x256xf32>
    %c0_4 = arith.constant 0 : index
    %c0_5 = arith.constant 0 : index
    %c0_6 = arith.constant 0 : index
    %3 = vector.load %arg2[%c0_4, %c0_5, %c0_6] : memref<1x4x256xf32, #tpu.memory_space<vmem>>, vector<1x4x256xf32>
    %4 = vector.shape_cast %3 : vector<1x4x256xf32> to vector<4x256xf32>
    %c0_7 = arith.constant 0 : index
    %c0_8 = arith.constant 0 : index
    %c0_9 = arith.constant 0 : index
    %5 = vector.load %arg3[%c0_7, %c0_8, %c0_9] : memref<1x4x256xf32, #tpu.memory_space<vmem>>, vector<1x4x256xf32>
    %6 = vector.shape_cast %5 : vector<1x4x256xf32> to vector<4x256xf32>
    %c0_10 = arith.constant 0 : index
    %c0_11 = arith.constant 0 : index
    %7 = vector.load %arg5[%c0_10, %c0_11] : memref<4x36xf32, #tpu.memory_space<vmem>>, vector<4x36xf32>
    %c0_12 = arith.constant 0 : index
    %c0_13 = arith.constant 0 : index
    %8 = vector.load %arg6[%c0_12, %c0_13] : memref<4x1xf32, #tpu.memory_space<vmem>>, vector<4x1xf32>
    %c17_i32 = arith.constant 17 : i32
    %9 = tpu.dynamic_rotate %2 by %c17_i32 dim 1 : vector<4x256xf32>, i32 -> vector<4x256xf32>
    %10 = vector.extract_strided_slice %0 {offsets = [0, 0], sizes = [1, 256], strides = [1, 1]} : vector<9x256xf32> to vector<1x256xf32>
    %11 = vector.broadcast %10 : vector<1x256xf32> to vector<4x256xf32>
    %12 = arith.mulf %9, %11 : vector<4x256xf32>
    %c16_i32 = arith.constant 16 : i32
    %13 = tpu.dynamic_rotate %2 by %c16_i32 dim 1 : vector<4x256xf32>, i32 -> vector<4x256xf32>
    %14 = vector.extract_strided_slice %0 {offsets = [1, 0], sizes = [1, 256], strides = [1, 1]} : vector<9x256xf32> to vector<1x256xf32>
    %15 = vector.broadcast %14 : vector<1x256xf32> to vector<4x256xf32>
    %16 = arith.mulf %13, %15 : vector<4x256xf32>
    %c15_i32 = arith.constant 15 : i32
    %17 = tpu.dynamic_rotate %2 by %c15_i32 dim 1 : vector<4x256xf32>, i32 -> vector<4x256xf32>
    %18 = vector.extract_strided_slice %0 {offsets = [2, 0], sizes = [1, 256], strides = [1, 1]} : vector<9x256xf32> to vector<1x256xf32>
    %19 = vector.broadcast %18 : vector<1x256xf32> to vector<4x256xf32>
    %20 = arith.mulf %17, %19 : vector<4x256xf32>
    %c1_i32 = arith.constant 1 : i32
    %21 = tpu.dynamic_rotate %2 by %c1_i32 dim 1 : vector<4x256xf32>, i32 -> vector<4x256xf32>
    %22 = vector.extract_strided_slice %0 {offsets = [3, 0], sizes = [1, 256], strides = [1, 1]} : vector<9x256xf32> to vector<1x256xf32>
    %23 = vector.broadcast %22 : vector<1x256xf32> to vector<4x256xf32>
    %24 = arith.mulf %21, %23 : vector<4x256xf32>
    %c255_i32 = arith.constant 255 : i32
    %25 = tpu.dynamic_rotate %2 by %c255_i32 dim 1 : vector<4x256xf32>, i32 -> vector<4x256xf32>
    %26 = vector.extract_strided_slice %0 {offsets = [5, 0], sizes = [1, 256], strides = [1, 1]} : vector<9x256xf32> to vector<1x256xf32>
    %27 = vector.broadcast %26 : vector<1x256xf32> to vector<4x256xf32>
    %28 = arith.mulf %25, %27 : vector<4x256xf32>
    %c241_i32 = arith.constant 241 : i32
    %29 = tpu.dynamic_rotate %2 by %c241_i32 dim 1 : vector<4x256xf32>, i32 -> vector<4x256xf32>
    %30 = vector.extract_strided_slice %0 {offsets = [6, 0], sizes = [1, 256], strides = [1, 1]} : vector<9x256xf32> to vector<1x256xf32>
    %31 = vector.broadcast %30 : vector<1x256xf32> to vector<4x256xf32>
    %32 = arith.mulf %29, %31 : vector<4x256xf32>
    %c240_i32 = arith.constant 240 : i32
    %33 = tpu.dynamic_rotate %2 by %c240_i32 dim 1 : vector<4x256xf32>, i32 -> vector<4x256xf32>
    %34 = vector.extract_strided_slice %0 {offsets = [7, 0], sizes = [1, 256], strides = [1, 1]} : vector<9x256xf32> to vector<1x256xf32>
    %35 = vector.broadcast %34 : vector<1x256xf32> to vector<4x256xf32>
    %36 = arith.mulf %33, %35 : vector<4x256xf32>
    %c239_i32 = arith.constant 239 : i32
    %37 = tpu.dynamic_rotate %2 by %c239_i32 dim 1 : vector<4x256xf32>, i32 -> vector<4x256xf32>
    %38 = vector.extract_strided_slice %0 {offsets = [8, 0], sizes = [1, 256], strides = [1, 1]} : vector<9x256xf32> to vector<1x256xf32>
    %39 = vector.broadcast %38 : vector<1x256xf32> to vector<4x256xf32>
    %40 = arith.mulf %37, %39 : vector<4x256xf32>
    %41 = tpu.concatenate %12, %16, %20, %24, %2, %28, %32, %36, %40 in 0 : vector<4x256xf32>, vector<4x256xf32>, vector<4x256xf32>, vector<4x256xf32>, vector<4x256xf32>, vector<4x256xf32>, vector<4x256xf32>, vector<4x256xf32>, vector<4x256xf32> -> vector<36x256xf32>
    %cst = arith.constant dense<0.000000e+00> : vector<4x256xf32>
    %42 = tpu.matmul %7, %41, %cst {dimension_numbers = #tpu.dot_dimension_numbers<[1], [0], [0], [1], [0, 0, 1, 1], [], []>} : vector<4x36xf32>, vector<36x256xf32>, vector<4x256xf32> -> vector<4x256xf32>
    %43 = vector.broadcast %8 : vector<4x1xf32> to vector<4x256xf32>
    %44 = arith.addf %42, %43 : vector<4x256xf32>
    %cst_14 = arith.constant 0.000000e+00 : f32
    %45 = vector.broadcast %cst_14 : f32 to vector<4x256xf32>
    %46 = arith.cmpf ogt, %44, %45 : vector<4x256xf32>
    %cst_15 = arith.constant 2.000000e-01 : f32
    %47 = vector.broadcast %cst_15 : f32 to vector<4x256xf32>
    %48 = arith.mulf %47, %44 : vector<4x256xf32>
    %49 = arith.select %46, %44, %48 : vector<4x256xi1>, vector<4x256xf32>
    %c0_16 = arith.constant 0 : index
    %c0_17 = arith.constant 0 : index
    %50 = vector.load %arg7[%c0_16, %c0_17] : memref<4x36xf32, #tpu.memory_space<vmem>>, vector<4x36xf32>
    %c0_18 = arith.constant 0 : index
    %c0_19 = arith.constant 0 : index
    %51 = vector.load %arg8[%c0_18, %c0_19] : memref<4x1xf32, #tpu.memory_space<vmem>>, vector<4x1xf32>
    %c17_i32_20 = arith.constant 17 : i32
    %52 = tpu.dynamic_rotate %49 by %c17_i32_20 dim 1 : vector<4x256xf32>, i32 -> vector<4x256xf32>
    %53 = vector.extract_strided_slice %0 {offsets = [0, 0], sizes = [1, 256], strides = [1, 1]} : vector<9x256xf32> to vector<1x256xf32>
    %54 = vector.broadcast %53 : vector<1x256xf32> to vector<4x256xf32>
    %55 = arith.mulf %52, %54 : vector<4x256xf32>
    %c16_i32_21 = arith.constant 16 : i32
    %56 = tpu.dynamic_rotate %49 by %c16_i32_21 dim 1 : vector<4x256xf32>, i32 -> vector<4x256xf32>
    %57 = vector.extract_strided_slice %0 {offsets = [1, 0], sizes = [1, 256], strides = [1, 1]} : vector<9x256xf32> to vector<1x256xf32>
    %58 = vector.broadcast %57 : vector<1x256xf32> to vector<4x256xf32>
    %59 = arith.mulf %56, %58 : vector<4x256xf32>
    %c15_i32_22 = arith.constant 15 : i32
    %60 = tpu.dynamic_rotate %49 by %c15_i32_22 dim 1 : vector<4x256xf32>, i32 -> vector<4x256xf32>
    %61 = vector.extract_strided_slice %0 {offsets = [2, 0], sizes = [1, 256], strides = [1, 1]} : vector<9x256xf32> to vector<1x256xf32>
    %62 = vector.broadcast %61 : vector<1x256xf32> to vector<4x256xf32>
    %63 = arith.mulf %60, %62 : vector<4x256xf32>
    %c1_i32_23 = arith.constant 1 : i32
    %64 = tpu.dynamic_rotate %49 by %c1_i32_23 dim 1 : vector<4x256xf32>, i32 -> vector<4x256xf32>
    %65 = vector.extract_strided_slice %0 {offsets = [3, 0], sizes = [1, 256], strides = [1, 1]} : vector<9x256xf32> to vector<1x256xf32>
    %66 = vector.broadcast %65 : vector<1x256xf32> to vector<4x256xf32>
    %67 = arith.mulf %64, %66 : vector<4x256xf32>
    %c255_i32_24 = arith.constant 255 : i32
    %68 = tpu.dynamic_rotate %49 by %c255_i32_24 dim 1 : vector<4x256xf32>, i32 -> vector<4x256xf32>
    %69 = vector.extract_strided_slice %0 {offsets = [5, 0], sizes = [1, 256], strides = [1, 1]} : vector<9x256xf32> to vector<1x256xf32>
    %70 = vector.broadcast %69 : vector<1x256xf32> to vector<4x256xf32>
    %71 = arith.mulf %68, %70 : vector<4x256xf32>
    %c241_i32_25 = arith.constant 241 : i32
    %72 = tpu.dynamic_rotate %49 by %c241_i32_25 dim 1 : vector<4x256xf32>, i32 -> vector<4x256xf32>
    %73 = vector.extract_strided_slice %0 {offsets = [6, 0], sizes = [1, 256], strides = [1, 1]} : vector<9x256xf32> to vector<1x256xf32>
    %74 = vector.broadcast %73 : vector<1x256xf32> to vector<4x256xf32>
    %75 = arith.mulf %72, %74 : vector<4x256xf32>
    %c240_i32_26 = arith.constant 240 : i32
    %76 = tpu.dynamic_rotate %49 by %c240_i32_26 dim 1 : vector<4x256xf32>, i32 -> vector<4x256xf32>
    %77 = vector.extract_strided_slice %0 {offsets = [7, 0], sizes = [1, 256], strides = [1, 1]} : vector<9x256xf32> to vector<1x256xf32>
    %78 = vector.broadcast %77 : vector<1x256xf32> to vector<4x256xf32>
    %79 = arith.mulf %76, %78 : vector<4x256xf32>
    %c239_i32_27 = arith.constant 239 : i32
    %80 = tpu.dynamic_rotate %49 by %c239_i32_27 dim 1 : vector<4x256xf32>, i32 -> vector<4x256xf32>
    %81 = vector.extract_strided_slice %0 {offsets = [8, 0], sizes = [1, 256], strides = [1, 1]} : vector<9x256xf32> to vector<1x256xf32>
    %82 = vector.broadcast %81 : vector<1x256xf32> to vector<4x256xf32>
    %83 = arith.mulf %80, %82 : vector<4x256xf32>
    %84 = tpu.concatenate %55, %59, %63, %67, %49, %71, %75, %79, %83 in 0 : vector<4x256xf32>, vector<4x256xf32>, vector<4x256xf32>, vector<4x256xf32>, vector<4x256xf32>, vector<4x256xf32>, vector<4x256xf32>, vector<4x256xf32>, vector<4x256xf32> -> vector<36x256xf32>
    %cst_28 = arith.constant dense<0.000000e+00> : vector<4x256xf32>
    %85 = tpu.matmul %50, %84, %cst_28 {dimension_numbers = #tpu.dot_dimension_numbers<[1], [0], [0], [1], [0, 0, 1, 1], [], []>} : vector<4x36xf32>, vector<36x256xf32>, vector<4x256xf32> -> vector<4x256xf32>
    %86 = vector.broadcast %51 : vector<4x1xf32> to vector<4x256xf32>
    %87 = arith.addf %85, %86 : vector<4x256xf32>
    %c0_29 = arith.constant 0 : index
    %c0_30 = arith.constant 0 : index
    %88 = vector.load %arg9[%c0_29, %c0_30] : memref<4x36xf32, #tpu.memory_space<vmem>>, vector<4x36xf32>
    %c0_31 = arith.constant 0 : index
    %c0_32 = arith.constant 0 : index
    %89 = vector.load %arg10[%c0_31, %c0_32] : memref<4x1xf32, #tpu.memory_space<vmem>>, vector<4x1xf32>
    %c17_i32_33 = arith.constant 17 : i32
    %90 = tpu.dynamic_rotate %4 by %c17_i32_33 dim 1 : vector<4x256xf32>, i32 -> vector<4x256xf32>
    %91 = vector.extract_strided_slice %0 {offsets = [0, 0], sizes = [1, 256], strides = [1, 1]} : vector<9x256xf32> to vector<1x256xf32>
    %92 = vector.broadcast %91 : vector<1x256xf32> to vector<4x256xf32>
    %93 = arith.mulf %90, %92 : vector<4x256xf32>
    %c16_i32_34 = arith.constant 16 : i32
    %94 = tpu.dynamic_rotate %4 by %c16_i32_34 dim 1 : vector<4x256xf32>, i32 -> vector<4x256xf32>
    %95 = vector.extract_strided_slice %0 {offsets = [1, 0], sizes = [1, 256], strides = [1, 1]} : vector<9x256xf32> to vector<1x256xf32>
    %96 = vector.broadcast %95 : vector<1x256xf32> to vector<4x256xf32>
    %97 = arith.mulf %94, %96 : vector<4x256xf32>
    %c15_i32_35 = arith.constant 15 : i32
    %98 = tpu.dynamic_rotate %4 by %c15_i32_35 dim 1 : vector<4x256xf32>, i32 -> vector<4x256xf32>
    %99 = vector.extract_strided_slice %0 {offsets = [2, 0], sizes = [1, 256], strides = [1, 1]} : vector<9x256xf32> to vector<1x256xf32>
    %100 = vector.broadcast %99 : vector<1x256xf32> to vector<4x256xf32>
    %101 = arith.mulf %98, %100 : vector<4x256xf32>
    %c1_i32_36 = arith.constant 1 : i32
    %102 = tpu.dynamic_rotate %4 by %c1_i32_36 dim 1 : vector<4x256xf32>, i32 -> vector<4x256xf32>
    %103 = vector.extract_strided_slice %0 {offsets = [3, 0], sizes = [1, 256], strides = [1, 1]} : vector<9x256xf32> to vector<1x256xf32>
    %104 = vector.broadcast %103 : vector<1x256xf32> to vector<4x256xf32>
    %105 = arith.mulf %102, %104 : vector<4x256xf32>
    %c255_i32_37 = arith.constant 255 : i32
    %106 = tpu.dynamic_rotate %4 by %c255_i32_37 dim 1 : vector<4x256xf32>, i32 -> vector<4x256xf32>
    %107 = vector.extract_strided_slice %0 {offsets = [5, 0], sizes = [1, 256], strides = [1, 1]} : vector<9x256xf32> to vector<1x256xf32>
    %108 = vector.broadcast %107 : vector<1x256xf32> to vector<4x256xf32>
    %109 = arith.mulf %106, %108 : vector<4x256xf32>
    %c241_i32_38 = arith.constant 241 : i32
    %110 = tpu.dynamic_rotate %4 by %c241_i32_38 dim 1 : vector<4x256xf32>, i32 -> vector<4x256xf32>
    %111 = vector.extract_strided_slice %0 {offsets = [6, 0], sizes = [1, 256], strides = [1, 1]} : vector<9x256xf32> to vector<1x256xf32>
    %112 = vector.broadcast %111 : vector<1x256xf32> to vector<4x256xf32>
    %113 = arith.mulf %110, %112 : vector<4x256xf32>
    %c240_i32_39 = arith.constant 240 : i32
    %114 = tpu.dynamic_rotate %4 by %c240_i32_39 dim 1 : vector<4x256xf32>, i32 -> vector<4x256xf32>
    %115 = vector.extract_strided_slice %0 {offsets = [7, 0], sizes = [1, 256], strides = [1, 1]} : vector<9x256xf32> to vector<1x256xf32>
    %116 = vector.broadcast %115 : vector<1x256xf32> to vector<4x256xf32>
    %117 = arith.mulf %114, %116 : vector<4x256xf32>
    %c239_i32_40 = arith.constant 239 : i32
    %118 = tpu.dynamic_rotate %4 by %c239_i32_40 dim 1 : vector<4x256xf32>, i32 -> vector<4x256xf32>
    %119 = vector.extract_strided_slice %0 {offsets = [8, 0], sizes = [1, 256], strides = [1, 1]} : vector<9x256xf32> to vector<1x256xf32>
    %120 = vector.broadcast %119 : vector<1x256xf32> to vector<4x256xf32>
    %121 = arith.mulf %118, %120 : vector<4x256xf32>
    %122 = tpu.concatenate %93, %97, %101, %105, %4, %109, %113, %117, %121 in 0 : vector<4x256xf32>, vector<4x256xf32>, vector<4x256xf32>, vector<4x256xf32>, vector<4x256xf32>, vector<4x256xf32>, vector<4x256xf32>, vector<4x256xf32>, vector<4x256xf32> -> vector<36x256xf32>
    %cst_41 = arith.constant dense<0.000000e+00> : vector<4x256xf32>
    %123 = tpu.matmul %88, %122, %cst_41 {dimension_numbers = #tpu.dot_dimension_numbers<[1], [0], [0], [1], [0, 0, 1, 1], [], []>} : vector<4x36xf32>, vector<36x256xf32>, vector<4x256xf32> -> vector<4x256xf32>
    %124 = vector.broadcast %89 : vector<4x1xf32> to vector<4x256xf32>
    %125 = arith.addf %123, %124 : vector<4x256xf32>
    %cst_42 = arith.constant 0.000000e+00 : f32
    %126 = vector.broadcast %cst_42 : f32 to vector<4x256xf32>
    %127 = arith.cmpf ogt, %125, %126 : vector<4x256xf32>
    %cst_43 = arith.constant 2.000000e-01 : f32
    %128 = vector.broadcast %cst_43 : f32 to vector<4x256xf32>
    %129 = arith.mulf %128, %125 : vector<4x256xf32>
    %130 = arith.select %127, %125, %129 : vector<4x256xi1>, vector<4x256xf32>
    %c0_44 = arith.constant 0 : index
    %c0_45 = arith.constant 0 : index
    %131 = vector.load %arg11[%c0_44, %c0_45] : memref<4x36xf32, #tpu.memory_space<vmem>>, vector<4x36xf32>
    %c0_46 = arith.constant 0 : index
    %c0_47 = arith.constant 0 : index
    %132 = vector.load %arg12[%c0_46, %c0_47] : memref<4x1xf32, #tpu.memory_space<vmem>>, vector<4x1xf32>
    %c17_i32_48 = arith.constant 17 : i32
    %133 = tpu.dynamic_rotate %130 by %c17_i32_48 dim 1 : vector<4x256xf32>, i32 -> vector<4x256xf32>
    %134 = vector.extract_strided_slice %0 {offsets = [0, 0], sizes = [1, 256], strides = [1, 1]} : vector<9x256xf32> to vector<1x256xf32>
    %135 = vector.broadcast %134 : vector<1x256xf32> to vector<4x256xf32>
    %136 = arith.mulf %133, %135 : vector<4x256xf32>
    %c16_i32_49 = arith.constant 16 : i32
    %137 = tpu.dynamic_rotate %130 by %c16_i32_49 dim 1 : vector<4x256xf32>, i32 -> vector<4x256xf32>
    %138 = vector.extract_strided_slice %0 {offsets = [1, 0], sizes = [1, 256], strides = [1, 1]} : vector<9x256xf32> to vector<1x256xf32>
    %139 = vector.broadcast %138 : vector<1x256xf32> to vector<4x256xf32>
    %140 = arith.mulf %137, %139 : vector<4x256xf32>
    %c15_i32_50 = arith.constant 15 : i32
    %141 = tpu.dynamic_rotate %130 by %c15_i32_50 dim 1 : vector<4x256xf32>, i32 -> vector<4x256xf32>
    %142 = vector.extract_strided_slice %0 {offsets = [2, 0], sizes = [1, 256], strides = [1, 1]} : vector<9x256xf32> to vector<1x256xf32>
    %143 = vector.broadcast %142 : vector<1x256xf32> to vector<4x256xf32>
    %144 = arith.mulf %141, %143 : vector<4x256xf32>
    %c1_i32_51 = arith.constant 1 : i32
    %145 = tpu.dynamic_rotate %130 by %c1_i32_51 dim 1 : vector<4x256xf32>, i32 -> vector<4x256xf32>
    %146 = vector.extract_strided_slice %0 {offsets = [3, 0], sizes = [1, 256], strides = [1, 1]} : vector<9x256xf32> to vector<1x256xf32>
    %147 = vector.broadcast %146 : vector<1x256xf32> to vector<4x256xf32>
    %148 = arith.mulf %145, %147 : vector<4x256xf32>
    %c255_i32_52 = arith.constant 255 : i32
    %149 = tpu.dynamic_rotate %130 by %c255_i32_52 dim 1 : vector<4x256xf32>, i32 -> vector<4x256xf32>
    %150 = vector.extract_strided_slice %0 {offsets = [5, 0], sizes = [1, 256], strides = [1, 1]} : vector<9x256xf32> to vector<1x256xf32>
    %151 = vector.broadcast %150 : vector<1x256xf32> to vector<4x256xf32>
    %152 = arith.mulf %149, %151 : vector<4x256xf32>
    %c241_i32_53 = arith.constant 241 : i32
    %153 = tpu.dynamic_rotate %130 by %c241_i32_53 dim 1 : vector<4x256xf32>, i32 -> vector<4x256xf32>
    %154 = vector.extract_strided_slice %0 {offsets = [6, 0], sizes = [1, 256], strides = [1, 1]} : vector<9x256xf32> to vector<1x256xf32>
    %155 = vector.broadcast %154 : vector<1x256xf32> to vector<4x256xf32>
    %156 = arith.mulf %153, %155 : vector<4x256xf32>
    %c240_i32_54 = arith.constant 240 : i32
    %157 = tpu.dynamic_rotate %130 by %c240_i32_54 dim 1 : vector<4x256xf32>, i32 -> vector<4x256xf32>
    %158 = vector.extract_strided_slice %0 {offsets = [7, 0], sizes = [1, 256], strides = [1, 1]} : vector<9x256xf32> to vector<1x256xf32>
    %159 = vector.broadcast %158 : vector<1x256xf32> to vector<4x256xf32>
    %160 = arith.mulf %157, %159 : vector<4x256xf32>
    %c239_i32_55 = arith.constant 239 : i32
    %161 = tpu.dynamic_rotate %130 by %c239_i32_55 dim 1 : vector<4x256xf32>, i32 -> vector<4x256xf32>
    %162 = vector.extract_strided_slice %0 {offsets = [8, 0], sizes = [1, 256], strides = [1, 1]} : vector<9x256xf32> to vector<1x256xf32>
    %163 = vector.broadcast %162 : vector<1x256xf32> to vector<4x256xf32>
    %164 = arith.mulf %161, %163 : vector<4x256xf32>
    %165 = tpu.concatenate %136, %140, %144, %148, %130, %152, %156, %160, %164 in 0 : vector<4x256xf32>, vector<4x256xf32>, vector<4x256xf32>, vector<4x256xf32>, vector<4x256xf32>, vector<4x256xf32>, vector<4x256xf32>, vector<4x256xf32>, vector<4x256xf32> -> vector<36x256xf32>
    %cst_56 = arith.constant dense<0.000000e+00> : vector<4x256xf32>
    %166 = tpu.matmul %131, %165, %cst_56 {dimension_numbers = #tpu.dot_dimension_numbers<[1], [0], [0], [1], [0, 0, 1, 1], [], []>} : vector<4x36xf32>, vector<36x256xf32>, vector<4x256xf32> -> vector<4x256xf32>
    %167 = vector.broadcast %132 : vector<4x1xf32> to vector<4x256xf32>
    %168 = arith.addf %166, %167 : vector<4x256xf32>
    %169 = tpu.concatenate %6, %87, %168 in 0 : vector<4x256xf32>, vector<4x256xf32>, vector<4x256xf32> -> vector<12x256xf32>
    %c0_57 = arith.constant 0 : index
    %c0_58 = arith.constant 0 : index
    %170 = vector.load %arg13[%c0_57, %c0_58] : memref<6x12xf32, #tpu.memory_space<vmem>>, vector<6x12xf32>
    %cst_59 = arith.constant dense<0.000000e+00> : vector<6x256xf32>
    %171 = tpu.matmul %170, %169, %cst_59 {dimension_numbers = #tpu.dot_dimension_numbers<[1], [0], [0], [1], [0, 0, 1, 1], [], []>} : vector<6x12xf32>, vector<12x256xf32>, vector<6x256xf32> -> vector<6x256xf32>
    %c0_60 = arith.constant 0 : index
    %c0_61 = arith.constant 0 : index
    %172 = vector.load %arg14[%c0_60, %c0_61] : memref<6x1xf32, #tpu.memory_space<vmem>>, vector<6x1xf32>
    %173 = vector.broadcast %172 : vector<6x1xf32> to vector<6x256xf32>
    %174 = arith.addf %171, %173 : vector<6x256xf32>
    %c0_62 = arith.constant 0 : index
    %c0_63 = arith.constant 0 : index
    %175 = vector.load %arg15[%c0_62, %c0_63] : memref<4x54xf32, #tpu.memory_space<vmem>>, vector<4x54xf32>
    %c17_i32_64 = arith.constant 17 : i32
    %176 = tpu.dynamic_rotate %174 by %c17_i32_64 dim 1 : vector<6x256xf32>, i32 -> vector<6x256xf32>
    %177 = vector.extract_strided_slice %0 {offsets = [0, 0], sizes = [1, 256], strides = [1, 1]} : vector<9x256xf32> to vector<1x256xf32>
    %178 = vector.broadcast %177 : vector<1x256xf32> to vector<6x256xf32>
    %179 = arith.mulf %176, %178 : vector<6x256xf32>
    %c16_i32_65 = arith.constant 16 : i32
    %180 = tpu.dynamic_rotate %174 by %c16_i32_65 dim 1 : vector<6x256xf32>, i32 -> vector<6x256xf32>
    %181 = vector.extract_strided_slice %0 {offsets = [1, 0], sizes = [1, 256], strides = [1, 1]} : vector<9x256xf32> to vector<1x256xf32>
    %182 = vector.broadcast %181 : vector<1x256xf32> to vector<6x256xf32>
    %183 = arith.mulf %180, %182 : vector<6x256xf32>
    %c15_i32_66 = arith.constant 15 : i32
    %184 = tpu.dynamic_rotate %174 by %c15_i32_66 dim 1 : vector<6x256xf32>, i32 -> vector<6x256xf32>
    %185 = vector.extract_strided_slice %0 {offsets = [2, 0], sizes = [1, 256], strides = [1, 1]} : vector<9x256xf32> to vector<1x256xf32>
    %186 = vector.broadcast %185 : vector<1x256xf32> to vector<6x256xf32>
    %187 = arith.mulf %184, %186 : vector<6x256xf32>
    %c1_i32_67 = arith.constant 1 : i32
    %188 = tpu.dynamic_rotate %174 by %c1_i32_67 dim 1 : vector<6x256xf32>, i32 -> vector<6x256xf32>
    %189 = vector.extract_strided_slice %0 {offsets = [3, 0], sizes = [1, 256], strides = [1, 1]} : vector<9x256xf32> to vector<1x256xf32>
    %190 = vector.broadcast %189 : vector<1x256xf32> to vector<6x256xf32>
    %191 = arith.mulf %188, %190 : vector<6x256xf32>
    %c255_i32_68 = arith.constant 255 : i32
    %192 = tpu.dynamic_rotate %174 by %c255_i32_68 dim 1 : vector<6x256xf32>, i32 -> vector<6x256xf32>
    %193 = vector.extract_strided_slice %0 {offsets = [5, 0], sizes = [1, 256], strides = [1, 1]} : vector<9x256xf32> to vector<1x256xf32>
    %194 = vector.broadcast %193 : vector<1x256xf32> to vector<6x256xf32>
    %195 = arith.mulf %192, %194 : vector<6x256xf32>
    %c241_i32_69 = arith.constant 241 : i32
    %196 = tpu.dynamic_rotate %174 by %c241_i32_69 dim 1 : vector<6x256xf32>, i32 -> vector<6x256xf32>
    %197 = vector.extract_strided_slice %0 {offsets = [6, 0], sizes = [1, 256], strides = [1, 1]} : vector<9x256xf32> to vector<1x256xf32>
    %198 = vector.broadcast %197 : vector<1x256xf32> to vector<6x256xf32>
    %199 = arith.mulf %196, %198 : vector<6x256xf32>
    %c240_i32_70 = arith.constant 240 : i32
    %200 = tpu.dynamic_rotate %174 by %c240_i32_70 dim 1 : vector<6x256xf32>, i32 -> vector<6x256xf32>
    %201 = vector.extract_strided_slice %0 {offsets = [7, 0], sizes = [1, 256], strides = [1, 1]} : vector<9x256xf32> to vector<1x256xf32>
    %202 = vector.broadcast %201 : vector<1x256xf32> to vector<6x256xf32>
    %203 = arith.mulf %200, %202 : vector<6x256xf32>
    %c239_i32_71 = arith.constant 239 : i32
    %204 = tpu.dynamic_rotate %174 by %c239_i32_71 dim 1 : vector<6x256xf32>, i32 -> vector<6x256xf32>
    %205 = vector.extract_strided_slice %0 {offsets = [8, 0], sizes = [1, 256], strides = [1, 1]} : vector<9x256xf32> to vector<1x256xf32>
    %206 = vector.broadcast %205 : vector<1x256xf32> to vector<6x256xf32>
    %207 = arith.mulf %204, %206 : vector<6x256xf32>
    %208 = tpu.concatenate %179, %183, %187, %191, %174, %195, %199, %203, %207 in 0 : vector<6x256xf32>, vector<6x256xf32>, vector<6x256xf32>, vector<6x256xf32>, vector<6x256xf32>, vector<6x256xf32>, vector<6x256xf32>, vector<6x256xf32>, vector<6x256xf32> -> vector<54x256xf32>
    %cst_72 = arith.constant dense<0.000000e+00> : vector<4x256xf32>
    %209 = tpu.matmul %175, %208, %cst_72 {dimension_numbers = #tpu.dot_dimension_numbers<[1], [0], [0], [1], [0, 0, 1, 1], [], []>} : vector<4x54xf32>, vector<54x256xf32>, vector<4x256xf32> -> vector<4x256xf32>
    %cst_73 = arith.constant 0.000000e+00 : f32
    %210 = vector.broadcast %cst_73 : f32 to vector<4x256xf32>
    %211 = arith.cmpf ogt, %209, %210 : vector<4x256xf32>
    %cst_74 = arith.constant 2.000000e-01 : f32
    %212 = vector.broadcast %cst_74 : f32 to vector<4x256xf32>
    %213 = arith.mulf %212, %209 : vector<4x256xf32>
    %214 = arith.select %211, %209, %213 : vector<4x256xi1>, vector<4x256xf32>
    %c0_75 = arith.constant 0 : index
    %c0_76 = arith.constant 0 : index
    %215 = vector.load %arg16[%c0_75, %c0_76] : memref<4x36xf32, #tpu.memory_space<vmem>>, vector<4x36xf32>
    %c17_i32_77 = arith.constant 17 : i32
    %216 = tpu.dynamic_rotate %214 by %c17_i32_77 dim 1 : vector<4x256xf32>, i32 -> vector<4x256xf32>
    %217 = vector.extract_strided_slice %0 {offsets = [0, 0], sizes = [1, 256], strides = [1, 1]} : vector<9x256xf32> to vector<1x256xf32>
    %218 = vector.broadcast %217 : vector<1x256xf32> to vector<4x256xf32>
    %219 = arith.mulf %216, %218 : vector<4x256xf32>
    %c16_i32_78 = arith.constant 16 : i32
    %220 = tpu.dynamic_rotate %214 by %c16_i32_78 dim 1 : vector<4x256xf32>, i32 -> vector<4x256xf32>
    %221 = vector.extract_strided_slice %0 {offsets = [1, 0], sizes = [1, 256], strides = [1, 1]} : vector<9x256xf32> to vector<1x256xf32>
    %222 = vector.broadcast %221 : vector<1x256xf32> to vector<4x256xf32>
    %223 = arith.mulf %220, %222 : vector<4x256xf32>
    %c15_i32_79 = arith.constant 15 : i32
    %224 = tpu.dynamic_rotate %214 by %c15_i32_79 dim 1 : vector<4x256xf32>, i32 -> vector<4x256xf32>
    %225 = vector.extract_strided_slice %0 {offsets = [2, 0], sizes = [1, 256], strides = [1, 1]} : vector<9x256xf32> to vector<1x256xf32>
    %226 = vector.broadcast %225 : vector<1x256xf32> to vector<4x256xf32>
    %227 = arith.mulf %224, %226 : vector<4x256xf32>
    %c1_i32_80 = arith.constant 1 : i32
    %228 = tpu.dynamic_rotate %214 by %c1_i32_80 dim 1 : vector<4x256xf32>, i32 -> vector<4x256xf32>
    %229 = vector.extract_strided_slice %0 {offsets = [3, 0], sizes = [1, 256], strides = [1, 1]} : vector<9x256xf32> to vector<1x256xf32>
    %230 = vector.broadcast %229 : vector<1x256xf32> to vector<4x256xf32>
    %231 = arith.mulf %228, %230 : vector<4x256xf32>
    %c255_i32_81 = arith.constant 255 : i32
    %232 = tpu.dynamic_rotate %214 by %c255_i32_81 dim 1 : vector<4x256xf32>, i32 -> vector<4x256xf32>
    %233 = vector.extract_strided_slice %0 {offsets = [5, 0], sizes = [1, 256], strides = [1, 1]} : vector<9x256xf32> to vector<1x256xf32>
    %234 = vector.broadcast %233 : vector<1x256xf32> to vector<4x256xf32>
    %235 = arith.mulf %232, %234 : vector<4x256xf32>
    %c241_i32_82 = arith.constant 241 : i32
    %236 = tpu.dynamic_rotate %214 by %c241_i32_82 dim 1 : vector<4x256xf32>, i32 -> vector<4x256xf32>
    %237 = vector.extract_strided_slice %0 {offsets = [6, 0], sizes = [1, 256], strides = [1, 1]} : vector<9x256xf32> to vector<1x256xf32>
    %238 = vector.broadcast %237 : vector<1x256xf32> to vector<4x256xf32>
    %239 = arith.mulf %236, %238 : vector<4x256xf32>
    %c240_i32_83 = arith.constant 240 : i32
    %240 = tpu.dynamic_rotate %214 by %c240_i32_83 dim 1 : vector<4x256xf32>, i32 -> vector<4x256xf32>
    %241 = vector.extract_strided_slice %0 {offsets = [7, 0], sizes = [1, 256], strides = [1, 1]} : vector<9x256xf32> to vector<1x256xf32>
    %242 = vector.broadcast %241 : vector<1x256xf32> to vector<4x256xf32>
    %243 = arith.mulf %240, %242 : vector<4x256xf32>
    %c239_i32_84 = arith.constant 239 : i32
    %244 = tpu.dynamic_rotate %214 by %c239_i32_84 dim 1 : vector<4x256xf32>, i32 -> vector<4x256xf32>
    %245 = vector.extract_strided_slice %0 {offsets = [8, 0], sizes = [1, 256], strides = [1, 1]} : vector<9x256xf32> to vector<1x256xf32>
    %246 = vector.broadcast %245 : vector<1x256xf32> to vector<4x256xf32>
    %247 = arith.mulf %244, %246 : vector<4x256xf32>
    %248 = tpu.concatenate %219, %223, %227, %231, %214, %235, %239, %243, %247 in 0 : vector<4x256xf32>, vector<4x256xf32>, vector<4x256xf32>, vector<4x256xf32>, vector<4x256xf32>, vector<4x256xf32>, vector<4x256xf32>, vector<4x256xf32>, vector<4x256xf32> -> vector<36x256xf32>
    %cst_85 = arith.constant dense<0.000000e+00> : vector<4x256xf32>
    %249 = tpu.matmul %215, %248, %cst_85 {dimension_numbers = #tpu.dot_dimension_numbers<[1], [0], [0], [1], [0, 0, 1, 1], [], []>} : vector<4x36xf32>, vector<36x256xf32>, vector<4x256xf32> -> vector<4x256xf32>
    %250 = arith.subf %168, %87 : vector<4x256xf32>
    %251 = arith.mulf %250, %249 : vector<4x256xf32>
    %252 = arith.addf %87, %251 : vector<4x256xf32>
    %c0_86 = arith.constant 0 : index
    %c0_87 = arith.constant 0 : index
    %c0_88 = arith.constant 0 : index
    %253 = vector.load %arg17[%c0_86, %c0_87, %c0_88] : memref<1x4x256xf32, #tpu.memory_space<vmem>>, vector<1x4x256xf32>
    %254 = vector.shape_cast %253 : vector<1x4x256xf32> to vector<4x256xf32>
    %255 = vector.shape_cast %252 : vector<4x256xf32> to vector<1x4x256xf32>
    tpu.vector_store %arg17[%c0_86, %c0_87, %c0_88], %255 {strides = array<i32>} : memref<1x4x256xf32, #tpu.memory_space<vmem>>, vector<1x4x256xf32>,
    return
  }
  func.func @transform_0(%arg0: i32) -> (i32, i32, i32) {
    %c0_i32 = arith.constant 0 : i32
    %c0_i32_0 = arith.constant 0 : i32
    %c0_i32_1 = arith.constant 0 : i32
    return %arg0, %c0_i32, %c0_i32_0 : i32, i32, i32
  }
  func.func @transform_1(%arg0: i32) -> (i32, i32, i32) {
    %c0_i32 = arith.constant 0 : i32
    %c0_i32_0 = arith.constant 0 : i32
    %c0_i32_1 = arith.constant 0 : i32
    return %arg0, %c0_i32, %c0_i32_0 : i32, i32, i32
  }
  func.func @transform_2(%arg0: i32) -> (i32, i32, i32) {
    %c0_i32 = arith.constant 0 : i32
    %c0_i32_0 = arith.constant 0 : i32
    %c0_i32_1 = arith.constant 0 : i32
    return %arg0, %c0_i32, %c0_i32_0 : i32, i32, i32
  }
  func.func @transform_3(%arg0: i32) -> (i32, i32) {
    %c0_i32 = arith.constant 0 : i32
    %c0_i32_0 = arith.constant 0 : i32
    %c0_i32_1 = arith.constant 0 : i32
    return %c0_i32, %c0_i32_0 : i32, i32
  }
  func.func @transform_4(%arg0: i32) -> (i32, i32) {
    %c0_i32 = arith.constant 0 : i32
    %c0_i32_0 = arith.constant 0 : i32
    %c0_i32_1 = arith.constant 0 : i32
    return %c0_i32, %c0_i32_0 : i32, i32
  }
  func.func @transform_5(%arg0: i32) -> (i32, i32) {
    %c0_i32 = arith.constant 0 : i32
    %c0_i32_0 = arith.constant 0 : i32
    %c0_i32_1 = arith.constant 0 : i32
    return %c0_i32, %c0_i32_0 : i32, i32
  }
  func.func @transform_6(%arg0: i32) -> (i32, i32) {
    %c0_i32 = arith.constant 0 : i32
    %c0_i32_0 = arith.constant 0 : i32
    %c0_i32_1 = arith.constant 0 : i32
    return %c0_i32, %c0_i32_0 : i32, i32
  }
  func.func @transform_7(%arg0: i32) -> (i32, i32) {
    %c0_i32 = arith.constant 0 : i32
    %c0_i32_0 = arith.constant 0 : i32
    %c0_i32_1 = arith.constant 0 : i32
    return %c0_i32, %c0_i32_0 : i32, i32
  }
  func.func @transform_8(%arg0: i32) -> (i32, i32) {
    %c0_i32 = arith.constant 0 : i32
    %c0_i32_0 = arith.constant 0 : i32
    %c0_i32_1 = arith.constant 0 : i32
    return %c0_i32, %c0_i32_0 : i32, i32
  }
  func.func @transform_9(%arg0: i32) -> (i32, i32) {
    %c0_i32 = arith.constant 0 : i32
    %c0_i32_0 = arith.constant 0 : i32
    %c0_i32_1 = arith.constant 0 : i32
    return %c0_i32, %c0_i32_0 : i32, i32
  }
  func.func @transform_10(%arg0: i32) -> (i32, i32) {
    %c0_i32 = arith.constant 0 : i32
    %c0_i32_0 = arith.constant 0 : i32
    %c0_i32_1 = arith.constant 0 : i32
    return %c0_i32, %c0_i32_0 : i32, i32
  }
  func.func @transform_11(%arg0: i32) -> (i32, i32) {
    %c0_i32 = arith.constant 0 : i32
    %c0_i32_0 = arith.constant 0 : i32
    %c0_i32_1 = arith.constant 0 : i32
    return %c0_i32, %c0_i32_0 : i32, i32
  }
  func.func @transform_12(%arg0: i32) -> (i32, i32) {
    %c0_i32 = arith.constant 0 : i32
    %c0_i32_0 = arith.constant 0 : i32
    %c0_i32_1 = arith.constant 0 : i32
    return %c0_i32, %c0_i32_0 : i32, i32
  }
  func.func @transform_13(%arg0: i32) -> (i32, i32) {
    %c0_i32 = arith.constant 0 : i32
    %c0_i32_0 = arith.constant 0 : i32
    %c0_i32_1 = arith.constant 0 : i32
    return %c0_i32, %c0_i32_0 : i32, i32
  }
  func.func @transform_14(%arg0: i32) -> (i32, i32) {
    %c0_i32 = arith.constant 0 : i32
    %c0_i32_0 = arith.constant 0 : i32
    %c0_i32_1 = arith.constant 0 : i32
    return %c0_i32, %c0_i32_0 : i32, i32
  }
  func.func @transform_15(%arg0: i32) -> (i32, i32) {
    %c0_i32 = arith.constant 0 : i32
    %c0_i32_0 = arith.constant 0 : i32
    %c0_i32_1 = arith.constant 0 : i32
    return %c0_i32, %c0_i32_0 : i32, i32
  }
  func.func @transform_16(%arg0: i32) -> (i32, i32, i32) {
    %c0_i32 = arith.constant 0 : i32
    %c0_i32_0 = arith.constant 0 : i32
    %c0_i32_1 = arith.constant 0 : i32
    return %arg0, %c0_i32, %c0_i32_0 : i32, i32, i32
  }
}

</mosaic_0001>

<llo_original>
// kernel: tpu_custom_call.1
$region0: #{tpu_custom_call.1}
  #allocation0 [shape = 'u32[]', space=smem, size = 0x4, offset = 0x4, fixed_abs, tag = 'smem constant byte address 0x4 - core index']
  #allocation1 [shape = 'u32[72,128]{1,0:T(1,128)}', space=vmem, size = 0x9000, scoped, tag = 'internal scratch']
  %s0 = inlined_call_operand.hbm [shape: f32[2,4,256], index: 0, kind: input, shape index: {}]
  %s1 = inlined_call_operand.hbm [shape: f32[2,4,256], index: 1, kind: input, shape index: {}]
  %s2 = inlined_call_operand.hbm [shape: f32[2,4,256], index: 2, kind: input, shape index: {}]
  %s3 = inlined_call_operand.hbm [shape: f32[9,256], index: 3, kind: input, shape index: {}]
  %s4 = inlined_call_operand.vmem [shape: f32[4,36], index: 4, kind: input, shape index: {}]
  %s5 = inlined_call_operand.vmem [shape: f32[4,1], index: 5, kind: input, shape index: {}]
  %s6 = inlined_call_operand.vmem [shape: f32[4,36], index: 6, kind: input, shape index: {}]
  %s7 = inlined_call_operand.vmem [shape: f32[4,1], index: 7, kind: input, shape index: {}]
  %s8 = inlined_call_operand.vmem [shape: f32[4,36], index: 8, kind: input, shape index: {}]
  %s9 = inlined_call_operand.vmem [shape: f32[4,1], index: 9, kind: input, shape index: {}]
  %s10 = inlined_call_operand.vmem [shape: f32[4,36], index: 10, kind: input, shape index: {}]
  %s11 = inlined_call_operand.vmem [shape: f32[4,1], index: 11, kind: input, shape index: {}]
  %s12 = inlined_call_operand.vmem [shape: f32[6,12], index: 12, kind: input, shape index: {}]
  %s13 = inlined_call_operand.vmem [shape: f32[6,1], index: 13, kind: input, shape index: {}]
  %s14 = inlined_call_operand.vmem [shape: f32[4,54], index: 14, kind: input, shape index: {}]
  %s15 = inlined_call_operand.vmem [shape: f32[4,36], index: 15, kind: input, shape index: {}]
  %s16 = inlined_call_operand.hbm [shape: f32[2,4,256], index: 16, kind: output, shape index: {}]
  %s17 = sld [smem:[#allocation0]]
  $region113: #{tpu_custom_call.1} parent=0
    _
  %s19 = ssub.s32 1, %s17
  %s20 = scalar_select 0, %s19, %s17
  $region1: #{tpu_custom_call.1} parent=0
    #allocation2 [shape = 'u8[8192]{0}', space=vmem, size = 0x2000, scoped, tag = 'input window, operand 0']
    #allocation3 [shape = 's32[2]{0}', space=sflag, size = 0x8, scoped, tag = 'scoped memory for tpu_custom_call.1']
    #allocation4 [shape = 's32[2]{0}', space=sflag, size = 0x8, scoped, tag = 'scoped memory for tpu_custom_call.1']
    #allocation5 [shape = 'u8[8192]{0}', space=vmem, size = 0x2000, scoped, tag = 'input window, operand 1']
    #allocation6 [shape = 's32[2]{0}', space=sflag, size = 0x8, scoped, tag = 'scoped memory for tpu_custom_call.1']
    #allocation7 [shape = 'u8[8192]{0}', space=vmem, size = 0x2000, scoped, tag = 'input window, operand 2']
    #allocation8 [shape = 'u8[16384]{0}', space=vmem, size = 0x4000, scoped, tag = 'input window, operand 3, single buffered']
    #allocation9 [shape = 's32[1]{0}', space=sflag, size = 0x4, scoped, tag = 'scoped memory for tpu_custom_call.1']
    #allocation10 [shape = 'u8[8192]{0}', space=vmem, size = 0x2000, scoped, tag = 'output window, operand 0']
    %21 = vsyncpa [#allocation3], 0
    %s22 = scalar_lea.sflag [#allocation3], 1
    %23 = vsyncpa %s22, 0
    %24 = vsyncpa [#allocation6], 0
    %s25 = scalar_lea.sflag [#allocation6], 1
    %26 = vsyncpa %s25, 0
    %27 = vsyncpa [#allocation9], 0
    %28 = vsyncpa [#allocation4], 0
    %s29 = scalar_lea.sflag [#allocation4], 1
    %30 = vsyncpa %s29, 0
    loop: start=0, step=1, limit=4
    $region2: #{tpu_custom_call.1} parent=1 // loop_pre_header
      _
    $region3: #{tpu_custom_call.1} parent=1 // loop_header
      %s32 = sphi 0, %s36
      %p33 = scmp.ge.s32.totalorder %s32, 4
      %s42 = sphi 0, %s44
      %s45 = sphi 0, %s42
      %s46 = sphi 0, %s45
      %s62 = sphi 0, %s46
      %s68 = sphi 0, %s70
      %s71 = sphi 0, %s68
      %s72 = sphi 0, %s71
      %s88 = sphi 0, %s72
      %s94 = sphi 0, %s96
      %s97 = sphi 0, %s94
      %s98 = sphi 0, %s97
      %s114 = sphi 0, %s98
      %s118 = sphi 0, %s118
      %s120 = sphi 0, %s118
      %s121 = sphi 0, %s120
      %s135 = sphi 0, %s121
      %s139 = sphi 0, %s139
      %s141 = sphi 0, %s139
      %s142 = sphi 0, %s141
      %s156 = sphi 0, %s142
      %s160 = sphi 0, %s160
      %s162 = sphi 0, %s160
      %s163 = sphi 0, %s162
      %s177 = sphi 0, %s163
      %s181 = sphi 0, %s181
      %s183 = sphi 0, %s181
      %s184 = sphi 0, %s183
      %s198 = sphi 0, %s184
      %s202 = sphi 0, %s202
      %s204 = sphi 0, %s202
      %s205 = sphi 0, %s204
      %s219 = sphi 0, %s205
      %s223 = sphi 0, %s223
      %s225 = sphi 0, %s223
      %s226 = sphi 0, %s225
      %s240 = sphi 0, %s226
      %s244 = sphi 0, %s244
      %s246 = sphi 0, %s244
      %s247 = sphi 0, %s246
      %s261 = sphi 0, %s247
      %s265 = sphi 0, %s265
      %s267 = sphi 0, %s265
      %s268 = sphi 0, %s267
      %s282 = sphi 0, %s268
      %s286 = sphi 0, %s286
      %s288 = sphi 0, %s286
      %s289 = sphi 0, %s288
      %s303 = sphi 0, %s289
      %s307 = sphi 0, %s307
      %s309 = sphi 0, %s307
      %s310 = sphi 0, %s309
      %s324 = sphi 0, %s310
      %s328 = sphi 0, %s328
      %s330 = sphi 0, %s328
      %s331 = sphi 0, %s330
      %s345 = sphi 0, %s331
      %s349 = sphi 0, %s349
      %s351 = sphi 0, %s349
      %s352 = sphi 0, %s351
      %s366 = sphi 0, %s352
      %s370 = sphi 0, %s370
      %s372 = sphi 0, %s370
      %s373 = sphi 0, %s372
      %s387 = sphi 0, %s373
      %s393 = sphi 0, %s395
      %s396 = sphi 0, %s393
      %s397 = sphi 0, %s396
      %s413 = sphi 0, %s397
    $region4: #{tpu_custom_call.1} parent=1 // loop_header_branch
      %35 = sbr.rel (%p33) target = $region8
    $region5: #{tpu_custom_call.1} parent=1 // loop_body
      %s37 = ssub.s32 %s32, 1
      %s38 = ssub.s32 %s32, 2
      %s39 = sadd.s32 %s32, 1
      %s40 = ssub.s32 %s32, %s39
      %p41 = scmp.eq.s32.totalorder %s40, 0
      %s43 = sadd.s32 %s42, 1
      %s44 = scalar_select %p41, %s42, %s43
      %p47 = pneg %p41
      %p48 = scmp.eq.s32.totalorder %s32, 1
      %p49 = por %p47, %p48
      %p50 = scmp.ne.s32.totalorder %s42, %s45
      %p51 = scmp.eq.s32.totalorder %s32, 0
      %p52 = por %p50, %p51
      %p53 = scmp.ne.s32.totalorder %s42, %s45
      %p54 = scmp.eq.s32.totalorder %s37, 1
      %p55 = por %p53, %p54
      %p56 = scmp.ne.s32.totalorder %s45, %s46
      %p57 = scmp.eq.s32.totalorder %s37, 0
      %p58 = por %p56, %p57
      %p59 = scmp.ne.s32.totalorder %s45, %s46
      %p60 = scmp.eq.s32.totalorder %s38, 1
      %p61 = por %p59, %p60
      %p63 = scmp.ne.s32.totalorder %s46, %s62
      %p64 = scmp.eq.s32.totalorder %s38, 0
      %p65 = por %p63, %p64
      %s66 = ssub.s32 %s32, %s39
      %p67 = scmp.eq.s32.totalorder %s66, 0
      %s69 = sadd.s32 %s68, 1
      %s70 = scalar_select %p67, %s68, %s69
      %p73 = pneg %p67
      %p74 = scmp.eq.s32.totalorder %s32, 1
      %p75 = por %p73, %p74
      %p76 = scmp.ne.s32.totalorder %s68, %s71
      %p77 = scmp.eq.s32.totalorder %s32, 0
      %p78 = por %p76, %p77
      %p79 = scmp.ne.s32.totalorder %s68, %s71
      %p80 = scmp.eq.s32.totalorder %s37, 1
      %p81 = por %p79, %p80
      %p82 = scmp.ne.s32.totalorder %s71, %s72
      %p83 = scmp.eq.s32.totalorder %s37, 0
      %p84 = por %p82, %p83
      %p85 = scmp.ne.s32.totalorder %s71, %s72
      %p86 = scmp.eq.s32.totalorder %s38, 1
      %p87 = por %p85, %p86
      %p89 = scmp.ne.s32.totalorder %s72, %s88
      %p90 = scmp.eq.s32.totalorder %s38, 0
      %p91 = por %p89, %p90
      %s92 = ssub.s32 %s32, %s39
      %p93 = scmp.eq.s32.totalorder %s92, 0
      %s95 = sadd.s32 %s94, 1
      %s96 = scalar_select %p93, %s94, %s95
      %p99 = pneg %p93
      %p100 = scmp.eq.s32.totalorder %s32, 1
      %p101 = por %p99, %p100
      %p102 = scmp.ne.s32.totalorder %s94, %s97
      %p103 = scmp.eq.s32.totalorder %s32, 0
      %p104 = por %p102, %p103
      %p105 = scmp.ne.s32.totalorder %s94, %s97
      %p106 = scmp.eq.s32.totalorder %s37, 1
      %p107 = por %p105, %p106
      %p108 = scmp.ne.s32.totalorder %s97, %s98
      %p109 = scmp.eq.s32.totalorder %s37, 0
      %p110 = por %p108, %p109
      %p111 = scmp.ne.s32.totalorder %s97, %s98
      %p112 = scmp.eq.s32.totalorder %s38, 1
      %p113 = por %p111, %p112
      %p115 = scmp.ne.s32.totalorder %s98, %s114
      %p116 = scmp.eq.s32.totalorder %s38, 0
      %p117 = por %p115, %p116
      %s119 = sadd.s32 %s118, 1
      %p122 = scmp.eq.s32.totalorder %s32, 1
      %p123 = scmp.ne.s32.totalorder %s118, %s120
      %p124 = scmp.eq.s32.totalorder %s32, 0
      %p125 = por %p123, %p124
      %p126 = scmp.ne.s32.totalorder %s118, %s120
      %p127 = scmp.eq.s32.totalorder %s37, 1
      %p128 = por %p126, %p127
      %p129 = scmp.ne.s32.totalorder %s120, %s121
      %p130 = scmp.eq.s32.totalorder %s37, 0
      %p131 = por %p129, %p130
      %p132 = scmp.ne.s32.totalorder %s120, %s121
      %p133 = scmp.eq.s32.totalorder %s38, 1
      %p134 = por %p132, %p133
      %p136 = scmp.ne.s32.totalorder %s121, %s135
      %p137 = scmp.eq.s32.totalorder %s38, 0
      %p138 = por %p136, %p137
      %s140 = sadd.s32 %s139, 1
      %p143 = scmp.eq.s32.totalorder %s32, 1
      %p144 = scmp.ne.s32.totalorder %s139, %s141
      %p145 = scmp.eq.s32.totalorder %s32, 0
      %p146 = por %p144, %p145
      %p147 = scmp.ne.s32.totalorder %s139, %s141
      %p148 = scmp.eq.s32.totalorder %s37, 1
      %p149 = por %p147, %p148
      %p150 = scmp.ne.s32.totalorder %s141, %s142
      %p151 = scmp.eq.s32.totalorder %s37, 0
      %p152 = por %p150, %p151
      %p153 = scmp.ne.s32.totalorder %s141, %s142
      %p154 = scmp.eq.s32.totalorder %s38, 1
      %p155 = por %p153, %p154
      %p157 = scmp.ne.s32.totalorder %s142, %s156
      %p158 = scmp.eq.s32.totalorder %s38, 0
      %p159 = por %p157, %p158
      %s161 = sadd.s32 %s160, 1
      %p164 = scmp.eq.s32.totalorder %s32, 1
      %p165 = scmp.ne.s32.totalorder %s160, %s162
      %p166 = scmp.eq.s32.totalorder %s32, 0
      %p167 = por %p165, %p166
      %p168 = scmp.ne.s32.totalorder %s160, %s162
      %p169 = scmp.eq.s32.totalorder %s37, 1
      %p170 = por %p168, %p169
      %p171 = scmp.ne.s32.totalorder %s162, %s163
      %p172 = scmp.eq.s32.totalorder %s37, 0
      %p173 = por %p171, %p172
      %p174 = scmp.ne.s32.totalorder %s162, %s163
      %p175 = scmp.eq.s32.totalorder %s38, 1
      %p176 = por %p174, %p175
      %p178 = scmp.ne.s32.totalorder %s163, %s177
      %p179 = scmp.eq.s32.totalorder %s38, 0
      %p180 = por %p178, %p179
      %s182 = sadd.s32 %s181, 1
      %p185 = scmp.eq.s32.totalorder %s32, 1
      %p186 = scmp.ne.s32.totalorder %s181, %s183
      %p187 = scmp.eq.s32.totalorder %s32, 0
      %p188 = por %p186, %p187
      %p189 = scmp.ne.s32.totalorder %s181, %s183
      %p190 = scmp.eq.s32.totalorder %s37, 1
      %p191 = por %p189, %p190
      %p192 = scmp.ne.s32.totalorder %s183, %s184
      %p193 = scmp.eq.s32.totalorder %s37, 0
      %p194 = por %p192, %p193
      %p195 = scmp.ne.s32.totalorder %s183, %s184
      %p196 = scmp.eq.s32.totalorder %s38, 1
      %p197 = por %p195, %p196
      %p199 = scmp.ne.s32.totalorder %s184, %s198
      %p200 = scmp.eq.s32.totalorder %s38, 0
      %p201 = por %p199, %p200
      %s203 = sadd.s32 %s202, 1
      %p206 = scmp.eq.s32.totalorder %s32, 1
      %p207 = scmp.ne.s32.totalorder %s202, %s204
      %p208 = scmp.eq.s32.totalorder %s32, 0
      %p209 = por %p207, %p208
      %p210 = scmp.ne.s32.totalorder %s202, %s204
      %p211 = scmp.eq.s32.totalorder %s37, 1
      %p212 = por %p210, %p211
      %p213 = scmp.ne.s32.totalorder %s204, %s205
      %p214 = scmp.eq.s32.totalorder %s37, 0
      %p215 = por %p213, %p214
      %p216 = scmp.ne.s32.totalorder %s204, %s205
      %p217 = scmp.eq.s32.totalorder %s38, 1
      %p218 = por %p216, %p217
      %p220 = scmp.ne.s32.totalorder %s205, %s219
      %p221 = scmp.eq.s32.totalorder %s38, 0
      %p222 = por %p220, %p221
      %s224 = sadd.s32 %s223, 1
      %p227 = scmp.eq.s32.totalorder %s32, 1
      %p228 = scmp.ne.s32.totalorder %s223, %s225
      %p229 = scmp.eq.s32.totalorder %s32, 0
      %p230 = por %p228, %p229
      %p231 = scmp.ne.s32.totalorder %s223, %s225
      %p232 = scmp.eq.s32.totalorder %s37, 1
      %p233 = por %p231, %p232
      %p234 = scmp.ne.s32.totalorder %s225, %s226
      %p235 = scmp.eq.s32.totalorder %s37, 0
      %p236 = por %p234, %p235
      %p237 = scmp.ne.s32.totalorder %s225, %s226
      %p238 = scmp.eq.s32.totalorder %s38, 1
      %p239 = por %p237, %p238
      %p241 = scmp.ne.s32.totalorder %s226, %s240
      %p242 = scmp.eq.s32.totalorder %s38, 0
      %p243 = por %p241, %p242
      %s245 = sadd.s32 %s244, 1
      %p248 = scmp.eq.s32.totalorder %s32, 1
      %p249 = scmp.ne.s32.totalorder %s244, %s246
      %p250 = scmp.eq.s32.totalorder %s32, 0
      %p251 = por %p249, %p250
      %p252 = scmp.ne.s32.totalorder %s244, %s246
      %p253 = scmp.eq.s32.totalorder %s37, 1
      %p254 = por %p252, %p253
      %p255 = scmp.ne.s32.totalorder %s246, %s247
      %p256 = scmp.eq.s32.totalorder %s37, 0
      %p257 = por %p255, %p256
      %p258 = scmp.ne.s32.totalorder %s246, %s247
      %p259 = scmp.eq.s32.totalorder %s38, 1
      %p260 = por %p258, %p259
      %p262 = scmp.ne.s32.totalorder %s247, %s261
      %p263 = scmp.eq.s32.totalorder %s38, 0
      %p264 = por %p262, %p263
      %s266 = sadd.s32 %s265, 1
      %p269 = scmp.eq.s32.totalorder %s32, 1
      %p270 = scmp.ne.s32.totalorder %s265, %s267
      %p271 = scmp.eq.s32.totalorder %s32, 0
      %p272 = por %p270, %p271
      %p273 = scmp.ne.s32.totalorder %s265, %s267
      %p274 = scmp.eq.s32.totalorder %s37, 1
      %p275 = por %p273, %p274
      %p276 = scmp.ne.s32.totalorder %s267, %s268
      %p277 = scmp.eq.s32.totalorder %s37, 0
      %p278 = por %p276, %p277
      %p279 = scmp.ne.s32.totalorder %s267, %s268
      %p280 = scmp.eq.s32.totalorder %s38, 1
      %p281 = por %p279, %p280
      %p283 = scmp.ne.s32.totalorder %s268, %s282
      %p284 = scmp.eq.s32.totalorder %s38, 0
      %p285 = por %p283, %p284
      %s287 = sadd.s32 %s286, 1
      %p290 = scmp.eq.s32.totalorder %s32, 1
      %p291 = scmp.ne.s32.totalorder %s286, %s288
      %p292 = scmp.eq.s32.totalorder %s32, 0
      %p293 = por %p291, %p292
      %p294 = scmp.ne.s32.totalorder %s286, %s288
      %p295 = scmp.eq.s32.totalorder %s37, 1
      %p296 = por %p294, %p295
      %p297 = scmp.ne.s32.totalorder %s288, %s289
      %p298 = scmp.eq.s32.totalorder %s37, 0
      %p299 = por %p297, %p298
      %p300 = scmp.ne.s32.totalorder %s288, %s289
      %p301 = scmp.eq.s32.totalorder %s38, 1
      %p302 = por %p300, %p301
      %p304 = scmp.ne.s32.totalorder %s289, %s303
      %p305 = scmp.eq.s32.totalorder %s38, 0
      %p306 = por %p304, %p305
      %s308 = sadd.s32 %s307, 1
      %p311 = scmp.eq.s32.totalorder %s32, 1
      %p312 = scmp.ne.s32.totalorder %s307, %s309
      %p313 = scmp.eq.s32.totalorder %s32, 0
      %p314 = por %p312, %p313
      %p315 = scmp.ne.s32.totalorder %s307, %s309
      %p316 = scmp.eq.s32.totalorder %s37, 1
      %p317 = por %p315, %p316
      %p318 = scmp.ne.s32.totalorder %s309, %s310
      %p319 = scmp.eq.s32.totalorder %s37, 0
      %p320 = por %p318, %p319
      %p321 = scmp.ne.s32.totalorder %s309, %s310
      %p322 = scmp.eq.s32.totalorder %s38, 1
      %p323 = por %p321, %p322
      %p325 = scmp.ne.s32.totalorder %s310, %s324
      %p326 = scmp.eq.s32.totalorder %s38, 0
      %p327 = por %p325, %p326
      %s329 = sadd.s32 %s328, 1
      %p332 = scmp.eq.s32.totalorder %s32, 1
      %p333 = scmp.ne.s32.totalorder %s328, %s330
      %p334 = scmp.eq.s32.totalorder %s32, 0
      %p335 = por %p333, %p334
      %p336 = scmp.ne.s32.totalorder %s328, %s330
      %p337 = scmp.eq.s32.totalorder %s37, 1
      %p338 = por %p336, %p337
      %p339 = scmp.ne.s32.totalorder %s330, %s331
      %p340 = scmp.eq.s32.totalorder %s37, 0
      %p341 = por %p339, %p340
      %p342 = scmp.ne.s32.totalorder %s330, %s331
      %p343 = scmp.eq.s32.totalorder %s38, 1
      %p344 = por %p342, %p343
      %p346 = scmp.ne.s32.totalorder %s331, %s345
      %p347 = scmp.eq.s32.totalorder %s38, 0
      %p348 = por %p346, %p347
      %s350 = sadd.s32 %s349, 1
      %p353 = scmp.eq.s32.totalorder %s32, 1
      %p354 = scmp.ne.s32.totalorder %s349, %s351
      %p355 = scmp.eq.s32.totalorder %s32, 0
      %p356 = por %p354, %p355
      %p357 = scmp.ne.s32.totalorder %s349, %s351
      %p358 = scmp.eq.s32.totalorder %s37, 1
      %p359 = por %p357, %p358
      %p360 = scmp.ne.s32.totalorder %s351, %s352
      %p361 = scmp.eq.s32.totalorder %s37, 0
      %p362 = por %p360, %p361
      %p363 = scmp.ne.s32.totalorder %s351, %s352
      %p364 = scmp.eq.s32.totalorder %s38, 1
      %p365 = por %p363, %p364
      %p367 = scmp.ne.s32.totalorder %s352, %s366
      %p368 = scmp.eq.s32.totalorder %s38, 0
      %p369 = por %p367, %p368
      %s371 = sadd.s32 %s370, 1
      %p374 = scmp.eq.s32.totalorder %s32, 1
      %p375 = scmp.ne.s32.totalorder %s370, %s372
      %p376 = scmp.eq.s32.totalorder %s32, 0
      %p377 = por %p375, %p376
      %p378 = scmp.ne.s32.totalorder %s370, %s372
      %p379 = scmp.eq.s32.totalorder %s37, 1
      %p380 = por %p378, %p379
      %p381 = scmp.ne.s32.totalorder %s372, %s373
      %p382 = scmp.eq.s32.totalorder %s37, 0
      %p383 = por %p381, %p382
      %p384 = scmp.ne.s32.totalorder %s372, %s373
      %p385 = scmp.eq.s32.totalorder %s38, 1
      %p386 = por %p384, %p385
      %p388 = scmp.ne.s32.totalorder %s373, %s387
      %p389 = scmp.eq.s32.totalorder %s38, 0
      %p390 = por %p388, %p389
      %s391 = ssub.s32 %s32, %s39
      %p392 = scmp.eq.s32.totalorder %s391, 0
      %s394 = sadd.s32 %s393, 1
      %s395 = scalar_select %p392, %s393, %s394
      %p398 = pneg %p392
      %p399 = scmp.eq.s32.totalorder %s32, 1
      %p400 = por %p398, %p399
      %p401 = scmp.ne.s32.totalorder %s393, %s396
      %p402 = scmp.eq.s32.totalorder %s32, 0
      %p403 = por %p401, %p402
      %p404 = scmp.ne.s32.totalorder %s393, %s396
      %p405 = scmp.eq.s32.totalorder %s37, 1
      %p406 = por %p404, %p405
      %p407 = scmp.ne.s32.totalorder %s396, %s397
      %p408 = scmp.eq.s32.totalorder %s37, 0
      %p409 = por %p407, %p408
      %p410 = scmp.ne.s32.totalorder %s396, %s397
      %p411 = scmp.eq.s32.totalorder %s38, 1
      %p412 = por %p410, %p411
      %p414 = scmp.ne.s32.totalorder %s397, %s413
      %p415 = scmp.eq.s32.totalorder %s38, 0
      %p416 = por %p414, %p415
      %p417 = scmp.le.s32.totalorder 1, %s32
      %p418 = scmp.lt.s32.totalorder %s32, 3
      %p419 = pnand %p417, %p418
      %p420 = pneg %p419
      // Predicated region
      $region9: #{tpu_custom_call.1} parent=5 // pred_check
        _
      $region10: #{tpu_custom_call.1} parent=5 // pred_check_branch
        %422 = sbr.rel (%p419) target = $region12
      $region11: #{tpu_custom_call.1} parent=5 // pred_region
        %s423 = ssub.s32 %s32, 1
        // Predicated region
        $region13: #{tpu_custom_call.1} parent=11 // pred_check
          %p424 = pneg %p131
        $region14: #{tpu_custom_call.1} parent=11 // pred_check_branch
          %426 = sbr.rel (%p424) target = $region16
        $region15: #{tpu_custom_call.1} parent=11 // pred_region
          %428 = vsyncadd [#allocation9], 0
          %s429 = sshll.u32 %s3, 4
          %s430 = int_to_ptr.hbm [resolvable:$true] %s429
          %s431 = sshll.u32 [#allocation8], 4
          %s432 = int_to_ptr.vmem [resolvable:$true] %s431
          %437 = dma.hbm_to_vmem [thread:$0]  %s430, 512, %s432, [#allocation9], 256, 256, 16
        $region16: #{tpu_custom_call.1} parent=11 // pred_fallthru
          _
        // Predicated region
        $region17: #{tpu_custom_call.1} parent=11 // pred_check
          %p438 = pneg %p152
        $region18: #{tpu_custom_call.1} parent=11 // pred_check_branch
          %440 = sbr.rel (%p438) target = $region20
        $region19: #{tpu_custom_call.1} parent=11 // pred_region
          _
        $region20: #{tpu_custom_call.1} parent=11 // pred_fallthru
          _
        // Predicated region
        $region21: #{tpu_custom_call.1} parent=11 // pred_check
          %p441 = pneg %p173
        $region22: #{tpu_custom_call.1} parent=11 // pred_check_branch
          %443 = sbr.rel (%p441) target = $region24
        $region23: #{tpu_custom_call.1} parent=11 // pred_region
          _
        $region24: #{tpu_custom_call.1} parent=11 // pred_fallthru
          _
        // Predicated region
        $region25: #{tpu_custom_call.1} parent=11 // pred_check
          %p444 = pneg %p194
        $region26: #{tpu_custom_call.1} parent=11 // pred_check_branch
          %446 = sbr.rel (%p444) target = $region28
        $region27: #{tpu_custom_call.1} parent=11 // pred_region
          _
        $region28: #{tpu_custom_call.1} parent=11 // pred_fallthru
          _
        // Predicated region
        $region29: #{tpu_custom_call.1} parent=11 // pred_check
          %p447 = pneg %p215
        $region30: #{tpu_custom_call.1} parent=11 // pred_check_branch
          %449 = sbr.rel (%p447) target = $region32
        $region31: #{tpu_custom_call.1} parent=11 // pred_region
          _
        $region32: #{tpu_custom_call.1} parent=11 // pred_fallthru
          _
        // Predicated region
        $region33: #{tpu_custom_call.1} parent=11 // pred_check
          %p450 = pneg %p236
        $region34: #{tpu_custom_call.1} parent=11 // pred_check_branch
          %452 = sbr.rel (%p450) target = $region36
        $region35: #{tpu_custom_call.1} parent=11 // pred_region
          _
        $region36: #{tpu_custom_call.1} parent=11 // pred_fallthru
          _
        // Predicated region
        $region37: #{tpu_custom_call.1} parent=11 // pred_check
          %p453 = pneg %p257
        $region38: #{tpu_custom_call.1} parent=11 // pred_check_branch
          %455 = sbr.rel (%p453) target = $region40
        $region39: #{tpu_custom_call.1} parent=11 // pred_region
          _
        $region40: #{tpu_custom_call.1} parent=11 // pred_fallthru
          _
        // Predicated region
        $region41: #{tpu_custom_call.1} parent=11 // pred_check
          %p456 = pneg %p278
        $region42: #{tpu_custom_call.1} parent=11 // pred_check_branch
          %458 = sbr.rel (%p456) target = $region44
        $region43: #{tpu_custom_call.1} parent=11 // pred_region
          _
        $region44: #{tpu_custom_call.1} parent=11 // pred_fallthru
          _
        // Predicated region
        $region45: #{tpu_custom_call.1} parent=11 // pred_check
          %p459 = pneg %p299
        $region46: #{tpu_custom_call.1} parent=11 // pred_check_branch
          %461 = sbr.rel (%p459) target = $region48
        $region47: #{tpu_custom_call.1} parent=11 // pred_region
          _
        $region48: #{tpu_custom_call.1} parent=11 // pred_fallthru
          _
        // Predicated region
        $region49: #{tpu_custom_call.1} parent=11 // pred_check
          %p462 = pneg %p320
        $region50: #{tpu_custom_call.1} parent=11 // pred_check_branch
          %464 = sbr.rel (%p462) target = $region52
        $region51: #{tpu_custom_call.1} parent=11 // pred_region
          _
        $region52: #{tpu_custom_call.1} parent=11 // pred_fallthru
          _
        // Predicated region
        $region53: #{tpu_custom_call.1} parent=11 // pred_check
          %p465 = pneg %p341
        $region54: #{tpu_custom_call.1} parent=11 // pred_check_branch
          %467 = sbr.rel (%p465) target = $region56
        $region55: #{tpu_custom_call.1} parent=11 // pred_region
          _
        $region56: #{tpu_custom_call.1} parent=11 // pred_fallthru
          _
        // Predicated region
        $region57: #{tpu_custom_call.1} parent=11 // pred_check
          %p468 = pneg %p362
        $region58: #{tpu_custom_call.1} parent=11 // pred_check_branch
          %470 = sbr.rel (%p468) target = $region60
        $region59: #{tpu_custom_call.1} parent=11 // pred_region
          _
        $region60: #{tpu_custom_call.1} parent=11 // pred_fallthru
          _
        // Predicated region
        $region61: #{tpu_custom_call.1} parent=11 // pred_check
          %p471 = pneg %p383
        $region62: #{tpu_custom_call.1} parent=11 // pred_check_branch
          %473 = sbr.rel (%p471) target = $region64
        $region63: #{tpu_custom_call.1} parent=11 // pred_region
          _
        $region64: #{tpu_custom_call.1} parent=11 // pred_fallthru
          _
      $region12: #{tpu_custom_call.1} parent=5 // pred_fallthru
        _
      %p474 = scmp.lt.s32.totalorder %s32, 2
      // Predicated region
      $region65: #{tpu_custom_call.1} parent=5 // pred_check
        %p475 = pneg %p474
      $region66: #{tpu_custom_call.1} parent=5 // pred_check_branch
        %477 = sbr.rel (%p475) target = $region68
      $region67: #{tpu_custom_call.1} parent=5 // pred_region
        // Predicated region
        $region69: #{tpu_custom_call.1} parent=67 // pred_check
          %p478 = pneg %p52
        $region70: #{tpu_custom_call.1} parent=67 // pred_check_branch
          %480 = sbr.rel (%p478) target = $region72
        $region71: #{tpu_custom_call.1} parent=67 // pred_region
          %s481 = sand.u32 %s42, 1
          %s482 = scalar_lea.sflag [#allocation3], %s481
          %s483 = sand.u32 %s42, 1
          %s484 = smul.addr %s483, 8
          %s485 = scalar_lea.vmem [#allocation2], %s484
          %487 = vsyncadd %s482, 0
          %s488 = smul.addr %s32, 2
          %s489 = smul.addr %s488, 4
          %s490 = scalar_lea.hbm %s0, %s489
          %s492 = sshll.u32 %s490, 4
          %s493 = int_to_ptr.hbm [resolvable:$true] %s492
          %s494 = sshll.u32 %s485, 4
          %s495 = int_to_ptr.vmem [resolvable:$true] %s494
          %497 = dma.hbm_to_vmem [thread:$0]  %s493, 128, %s495, %s482
        $region72: #{tpu_custom_call.1} parent=67 // pred_fallthru
          _
        // Predicated region
        $region73: #{tpu_custom_call.1} parent=67 // pred_check
          %p498 = pneg %p78
        $region74: #{tpu_custom_call.1} parent=67 // pred_check_branch
          %500 = sbr.rel (%p498) target = $region76
        $region75: #{tpu_custom_call.1} parent=67 // pred_region
          %s501 = sand.u32 %s32, 1
          %s502 = scalar_lea.sflag [#allocation6], %s501
          %s503 = sand.u32 %s68, 1
          %s504 = smul.addr %s503, 8
          %s505 = scalar_lea.vmem [#allocation5], %s504
          %507 = vsyncadd %s502, 0
          %s508 = smul.addr %s32, 2
          %s509 = smul.addr %s508, 4
          %s510 = scalar_lea.hbm %s1, %s509
          %s512 = sshll.u32 %s510, 4
          %s513 = int_to_ptr.hbm [resolvable:$true] %s512
          %s514 = sshll.u32 %s505, 4
          %s515 = int_to_ptr.vmem [resolvable:$true] %s514
          %517 = dma.hbm_to_vmem [thread:$0]  %s513, 128, %s515, %s502
        $region76: #{tpu_custom_call.1} parent=67 // pred_fallthru
          _
        // Predicated region
        $region77: #{tpu_custom_call.1} parent=67 // pred_check
          %p518 = pneg %p104
        $region78: #{tpu_custom_call.1} parent=67 // pred_check_branch
          %520 = sbr.rel (%p518) target = $region80
        $region79: #{tpu_custom_call.1} parent=67 // pred_region
          %s521 = sand.u32 %s32, 1
          %s522 = scalar_lea.sflag [#allocation6], %s521
          %s523 = sand.u32 %s94, 1
          %s524 = smul.addr %s523, 8
          %s525 = scalar_lea.vmem [#allocation7], %s524
          %527 = vsyncadd %s522, 0
          %s528 = smul.addr %s32, 2
          %s529 = smul.addr %s528, 4
          %s530 = scalar_lea.hbm %s2, %s529
          %s532 = sshll.u32 %s530, 4
          %s533 = int_to_ptr.hbm [resolvable:$true] %s532
          %s534 = sshll.u32 %s525, 4
          %s535 = int_to_ptr.vmem [resolvable:$true] %s534
          %537 = dma.hbm_to_vmem [thread:$0]  %s533, 128, %s535, %s522
        $region80: #{tpu_custom_call.1} parent=67 // pred_fallthru
          _
      $region68: #{tpu_custom_call.1} parent=5 // pred_fallthru
        _
      %p538 = scmp.le.s32.totalorder 1, %s32
      %p539 = scmp.lt.s32.totalorder %s32, 3
      %p540 = pnand %p538, %p539
      %p541 = pneg %p540
      // Predicated region
      $region81: #{tpu_custom_call.1} parent=5 // pred_check
        _
      $region82: #{tpu_custom_call.1} parent=5 // pred_check_branch
        %543 = sbr.rel (%p540) target = $region84
      $region83: #{tpu_custom_call.1} parent=5 // pred_region
        %s544 = ssub.s32 %s32, 1
        %s545 = sand.u32 %s45, 1
        %s546 = scalar_lea.sflag [#allocation3], %s545
        %s547 = sand.u32 %s45, 1
        %s548 = smul.addr %s547, 8
        %s549 = scalar_lea.vmem [#allocation2], %s548
        // Predicated region
        $region85: #{tpu_custom_call.1} parent=83 // pred_check
          %p550 = pneg %p58
        $region86: #{tpu_custom_call.1} parent=83 // pred_check_branch
          %552 = sbr.rel (%p550) target = $region88
        $region87: #{tpu_custom_call.1} parent=83 // pred_region
          %554 = dma.done %s546, 128
        $region88: #{tpu_custom_call.1} parent=83 // pred_fallthru
          _
        %s555 = sand.u32 %s37, 1
        %s556 = scalar_lea.sflag [#allocation6], %s555
        %s557 = sand.u32 %s71, 1
        %s558 = smul.addr %s557, 8
        %s559 = scalar_lea.vmem [#allocation5], %s558
        // Predicated region
        $region89: #{tpu_custom_call.1} parent=83 // pred_check
          %p560 = pneg %p84
        $region90: #{tpu_custom_call.1} parent=83 // pred_check_branch
          %562 = sbr.rel (%p560) target = $region92
        $region91: #{tpu_custom_call.1} parent=83 // pred_region
          %564 = dma.done %s556, 128
        $region92: #{tpu_custom_call.1} parent=83 // pred_fallthru
          _
        %s565 = sand.u32 %s37, 1
        %s566 = scalar_lea.sflag [#allocation6], %s565
        %s567 = sand.u32 %s97, 1
        %s568 = smul.addr %s567, 8
        %s569 = scalar_lea.vmem [#allocation7], %s568
        // Predicated region
        $region93: #{tpu_custom_call.1} parent=83 // pred_check
          %p570 = pneg %p110
        $region94: #{tpu_custom_call.1} parent=83 // pred_check_branch
          %572 = sbr.rel (%p570) target = $region96
        $region95: #{tpu_custom_call.1} parent=83 // pred_region
          %574 = dma.done %s566, 128
        $region96: #{tpu_custom_call.1} parent=83 // pred_fallthru
          _
        // Predicated region
        $region97: #{tpu_custom_call.1} parent=83 // pred_check
          %p575 = pneg %p131
        $region98: #{tpu_custom_call.1} parent=83 // pred_check_branch
          %577 = sbr.rel (%p575) target = $region100
        $region99: #{tpu_custom_call.1} parent=83 // pred_region
          %579 = dma.done [#allocation9], 512
        $region100: #{tpu_custom_call.1} parent=83 // pred_fallthru
          _
        %s580 = sand.u32 %s45, 1
        %s581 = scalar_lea.sflag [#allocation3], %s580
        %s582 = sand.u32 %s45, 1
        %s583 = smul.addr %s582, 8
        %s584 = scalar_lea.vmem [#allocation2], %s583
        %p585 = pneg %p58
        %p586 = pneg %p55
        %s587 = sand.u32 %s37, 1
        %s588 = scalar_lea.sflag [#allocation6], %s587
        %s589 = sand.u32 %s71, 1
        %s590 = smul.addr %s589, 8
        %s591 = scalar_lea.vmem [#allocation5], %s590
        %p592 = pneg %p84
        %p593 = pneg %p81
        %s594 = sand.u32 %s37, 1
        %s595 = scalar_lea.sflag [#allocation6], %s594
        %s596 = sand.u32 %s97, 1
        %s597 = smul.addr %s596, 8
        %s598 = scalar_lea.vmem [#allocation7], %s597
        %p599 = pneg %p110
        %p600 = pneg %p107
        %p601 = pneg %p131
        %p602 = pneg %p128
        %p603 = pneg %p152
        %p604 = pneg %p149
        %p605 = pneg %p173
        %p606 = pneg %p170
        %p607 = pneg %p194
        %p608 = pneg %p191
        %p609 = pneg %p215
        %p610 = pneg %p212
        %p611 = pneg %p236
        %p612 = pneg %p233
        %p613 = pneg %p257
        %p614 = pneg %p254
        %p615 = pneg %p278
        %p616 = pneg %p275
        %p617 = pneg %p299
        %p618 = pneg %p296
        %p619 = pneg %p320
        %p620 = pneg %p317
        %p621 = pneg %p341
        %p622 = pneg %p338
        %p623 = pneg %p362
        %p624 = pneg %p359
        %p625 = pneg %p383
        %p626 = pneg %p380
        %p627 = pneg %p409
        %p628 = pneg %p406
        %s629 = sand.u32 %s396, 1
        %s630 = scalar_lea.sflag [#allocation4], %s629
        %s631 = sand.u32 %s396, 1
        %s632 = smul.addr %s631, 8
        %s633 = scalar_lea.vmem [#allocation10], %s632
        %v634 = vld [vmem:[#allocation8] sm:$0xff]
        %v635 = vld [vmem:[#allocation8 + $0x8] sm:$0xff]
        %v636 = vld [vmem:[#allocation8 + $0x10] sm:$0x1]
        %v637 = vld [vmem:[#allocation8 + $0x18] sm:$0x1]
        %v638 = vld [vmem:[%s549] sm:$0xff]
        %v639 = vld [vmem:[%s559] sm:$0xff]
        %v640 = vld [vmem:[%s569] sm:$0xff]
        %v641 = vld [vmem:[%s4] sm:$0xf]
        %v642 = vld [vmem:[%s5] sm:$0xf]
        %644 = vst [vmem:[#allocation1] ss:$2 sm:$0xff] %v638
        %v645 = vld.sshfl [vmem:[#allocation1] sm:$0xff pattern:$0x75316420]
        %v646 = vld.sshfl [vmem:[#allocation1 + $0x8] sm:$0xff pattern:$0x75316420]
        %649 = vrot.lane.b32.xlu0 %v645, 17
        %v650 = vpop.permute.xlu0 %649
        %651 = vrot.lane.b32.xlu0 %v646, 17
        %v652 = vpop.permute.xlu0 %651
        %v653 = vlaneseq
        %v654 = vand.u32 %v653, 127
        %vm655 = vcmp.lt.s32.totalorder %v654, 17
        %v656 = vsel %vm655, %v650, %v652
        %v657 = vsel %vm655, %v652, %v650
        %v658 = vperm.slane %v634, 0
        %v659 = vperm.slane %v635, 0
        %v660 = vmul.f32 %v657, %v658
        %v661 = vmul.f32 %v656, %v659
        %662 = vst [vmem:[#allocation1] ss:$2 sm:$0xff] %v638
        %v663 = vld.sshfl [vmem:[#allocation1] sm:$0xff pattern:$0x75316420]
        %v664 = vld.sshfl [vmem:[#allocation1 + $0x8] sm:$0xff pattern:$0x75316420]
        %667 = vrot.lane.b32.xlu0 %v663, 16
        %v668 = vpop.permute.xlu0 %667
        %669 = vrot.lane.b32.xlu0 %v664, 16
        %v670 = vpop.permute.xlu0 %669
        %vm671 = vcmp.lt.s32.totalorder %v654, 16
        %v672 = vsel %vm671, %v668, %v670
        %v673 = vsel %vm671, %v670, %v668
        %v674 = vperm.slane %v634, 1
        %v675 = vperm.slane %v635, 1
        %v676 = vmul.f32 %v673, %v674
        %v677 = vmul.f32 %v672, %v675
        %678 = vst [vmem:[#allocation1] ss:$2 sm:$0xff] %v638
        %v679 = vld.sshfl [vmem:[#allocation1] sm:$0xff pattern:$0x75316420]
        %v680 = vld.sshfl [vmem:[#allocation1 + $0x8] sm:$0xff pattern:$0x75316420]
        %683 = vrot.lane.b32.xlu0 %v679, 15
        %v684 = vpop.permute.xlu0 %683
        %685 = vrot.lane.b32.xlu0 %v680, 15
        %v686 = vpop.permute.xlu0 %685
        %vm687 = vcmp.lt.s32.totalorder %v654, 15
        %v688 = vsel %vm687, %v684, %v686
        %v689 = vsel %vm687, %v686, %v684
        %v690 = vperm.slane %v634, 2
        %v691 = vperm.slane %v635, 2
        %v692 = vmul.f32 %v689, %v690
        %v693 = vmul.f32 %v688, %v691
        %694 = vst [vmem:[#allocation1] ss:$2 sm:$0xff] %v638
        %v695 = vld.sshfl [vmem:[#allocation1] sm:$0xff pattern:$0x75316420]
        %v696 = vld.sshfl [vmem:[#allocation1 + $0x8] sm:$0xff pattern:$0x75316420]
        %699 = vrot.lane.b32.xlu0 %v695, 1
        %v700 = vpop.permute.xlu0 %699
        %701 = vrot.lane.b32.xlu0 %v696, 1
        %v702 = vpop.permute.xlu0 %701
        %vm703 = vcmp.lt.s32.totalorder %v654, 1
        %v704 = vsel %vm703, %v700, %v702
        %v705 = vsel %vm703, %v702, %v700
        %v706 = vperm.slane %v634, 3
        %v707 = vperm.slane %v635, 3
        %v708 = vmul.f32 %v705, %v706
        %v709 = vmul.f32 %v704, %v707
        %710 = vst [vmem:[#allocation1] ss:$2 sm:$0xff] %v638
        %v711 = vld.sshfl [vmem:[#allocation1] sm:$0xff pattern:$0x75316420]
        %v712 = vld.sshfl [vmem:[#allocation1 + $0x8] sm:$0xff pattern:$0x75316420]
        %715 = vrot.lane.b32.xlu0 %v711, 127
        %v716 = vpop.permute.xlu0 %715
        %717 = vrot.lane.b32.xlu0 %v712, 127
        %v718 = vpop.permute.xlu0 %717
        %vm719 = vcmp.lt.s32.totalorder %v654, 127
        %v720 = vsel %vm719, %v716, %v718
        %v721 = vsel %vm719, %v718, %v716
        %v722 = vperm.slane %v634, 5
        %v723 = vperm.slane %v635, 5
        %v724 = vmul.f32 %v720, %v722
        %v725 = vmul.f32 %v721, %v723
        %726 = vst [vmem:[#allocation1] ss:$2 sm:$0xff] %v638
        %v727 = vld.sshfl [vmem:[#allocation1] sm:$0xff pattern:$0x75316420]
        %v728 = vld.sshfl [vmem:[#allocation1 + $0x8] sm:$0xff pattern:$0x75316420]
        %731 = vrot.lane.b32.xlu0 %v727, 113
        %v732 = vpop.permute.xlu0 %731
        %733 = vrot.lane.b32.xlu0 %v728, 113
        %v734 = vpop.permute.xlu0 %733
        %vm735 = vcmp.lt.s32.totalorder %v654, 113
        %v736 = vsel %vm735, %v732, %v734
        %v737 = vsel %vm735, %v734, %v732
        %v738 = vperm.slane %v634, 6
        %v739 = vperm.slane %v635, 6
        %v740 = vmul.f32 %v736, %v738
        %v741 = vmul.f32 %v737, %v739
        %742 = vst [vmem:[#allocation1] ss:$2 sm:$0xff] %v638
        %v743 = vld.sshfl [vmem:[#allocation1] sm:$0xff pattern:$0x75316420]
        %v744 = vld.sshfl [vmem:[#allocation1 + $0x8] sm:$0xff pattern:$0x75316420]
        %747 = vrot.lane.b32.xlu0 %v743, 112
        %v748 = vpop.permute.xlu0 %747
        %749 = vrot.lane.b32.xlu0 %v744, 112
        %v750 = vpop.permute.xlu0 %749
        %vm751 = vcmp.lt.s32.totalorder %v654, 112
        %v752 = vsel %vm751, %v748, %v750
        %v753 = vsel %vm751, %v750, %v748
        %v754 = vperm.slane %v634, 7
        %v755 = vperm.slane %v635, 7
        %v756 = vmul.f32 %v752, %v754
        %v757 = vmul.f32 %v753, %v755
        %758 = vst [vmem:[#allocation1] ss:$2 sm:$0xff] %v638
        %v759 = vld.sshfl [vmem:[#allocation1] sm:$0xff pattern:$0x75316420]
        %v760 = vld.sshfl [vmem:[#allocation1 + $0x8] sm:$0xff pattern:$0x75316420]
        %763 = vrot.lane.b32.xlu0 %v759, 111
        %v764 = vpop.permute.xlu0 %763
        %765 = vrot.lane.b32.xlu0 %v760, 111
        %v766 = vpop.permute.xlu0 %765
        %vm767 = vcmp.lt.s32.totalorder %v654, 111
        %v768 = vsel %vm767, %v764, %v766
        %v769 = vsel %vm767, %v766, %v764
        %v770 = vperm.slane %v636, 0
        %v771 = vperm.slane %v637, 0
        %v772 = vmul.f32 %v768, %v770
        %v773 = vmul.f32 %v769, %v771
        %v776 = vrot.slane %v676, 4
        %v777 = vrot.slane %v677, 4
        %v782 = vrot.slane %v708, 4
        %v783 = vrot.slane %v709, 4
        %786 = vst [vmem:[#allocation1] ss:$2 sm:$0xff] %v638
        %v787 = vld.sshfl [vmem:[#allocation1] sm:$0xff pattern:$0x75316420]
        %v788 = vld.sshfl [vmem:[#allocation1 + $0x8] sm:$0xff pattern:$0x75316420]
        %v793 = vrot.slane %v724, 4
        %v794 = vrot.slane %v725, 4
        %v799 = vrot.slane %v756, 4
        %v800 = vrot.slane %v757, 4
        %vm803 = vcmask 1043456
        %v804 = vsel %vm803, %v660, %v776
        %v805 = vsel %vm803, %v661, %v777
        %v806 = vsel %vm803, %v692, %v782
        %v807 = vsel %vm803, %v693, %v783
        %v808 = vsel %vm803, %v787, %v793
        %v809 = vsel %vm803, %v788, %v794
        %v810 = vsel %vm803, %v740, %v799
        %v811 = vsel %vm803, %v741, %v800
        %813 = vset.pattern.permute.xlu0 0
        %814 = vperm.xlu0 %813, %v642
        %v815 = vpop.permute.xlu0 %814
        %vm817 = vcmask 293888
        %v819 = vsel %vm817, %v641, 0
        %v822 = vsel %vm803, %v772, 0
        %v825 = vsel %vm803, %v773, 0
        %827 = vmatpush.msra.mxu0 0.0
        %828 = vmatpush.msra.mxu0 0.0
        %829 = vmatpush.msra.mxu0 0.0
        %830 = vmatpush.msra.mxu0 0.0
        %831 = vmatpush.msra.mxu0 0.0
        %832 = vmatpush.msra.mxu0 0.0
        %833 = vmatpush.msra.mxu0 0.0
        %834 = vmatpush.msra.mxu0 0.0
        %835 = vmatpush.msra.mxu0 0.0
        %836 = vmatpush.msra.mxu0 0.0
        %837 = vmatpush.msra.mxu0 0.0
        %838 = vmatpush.msra.mxu0 %v822
        %839 = vmatpush.msra.mxu0 %v810
        %840 = vmatpush.msra.mxu0 %v808
        %841 = vmatpush.msra.mxu0 %v806
        %842 = vmatpush.msra.mxu0 %v804
        %843 = vmatmul.f32.gmra.mxu0 %v819
        %v844 = vpop.f32.mrf.mxu0
        %v845 = vadd.f32 %v815, %v844
        %846 = vdwg.mxu0
        %847 = vmatpush.msra.mxu0 0.0
        %848 = vmatpush.msra.mxu0 0.0
        %849 = vmatpush.msra.mxu0 0.0
        %850 = vmatpush.msra.mxu0 0.0
        %851 = vmatpush.msra.mxu0 0.0
        %852 = vmatpush.msra.mxu0 0.0
        %853 = vmatpush.msra.mxu0 0.0
        %854 = vmatpush.msra.mxu0 0.0
        %855 = vmatpush.msra.mxu0 0.0
        %856 = vmatpush.msra.mxu0 0.0
        %857 = vmatpush.msra.mxu0 0.0
        %858 = vmatpush.msra.mxu0 %v825
        %859 = vmatpush.msra.mxu0 %v811
        %860 = vmatpush.msra.mxu0 %v809
        %861 = vmatpush.msra.mxu0 %v807
        %862 = vmatpush.msra.mxu0 %v805
        %863 = vmatmul.f32.gmra.mxu0 %v819
        %v864 = vpop.f32.mrf.mxu0
        %v865 = vadd.f32 %v815, %v864
        %866 = vdwg.mxu0
        %vm867 = vcmp.gt.f32.partialorder %v845, 0.0
        %vm868 = vcmp.gt.f32.partialorder %v865, 0.0
        %v869 = vmul.f32 %v845, 0.2
        %v870 = vmul.f32 %v865, 0.2
        %v871 = vsel %vm867, %v845, %v869
        %v872 = vsel %vm868, %v865, %v870
        %v873 = vld [vmem:[%s6] sm:$0xf]
        %v874 = vld [vmem:[%s7] sm:$0xf]
        %875 = vrot.lane.b32.xlu0 %v871, 17
        %v876 = vpop.permute.xlu0 %875
        %877 = vrot.lane.b32.xlu0 %v872, 17
        %v878 = vpop.permute.xlu0 %877
        %v879 = vsel %vm655, %v876, %v878
        %v880 = vsel %vm655, %v878, %v876
        %v881 = vmul.f32 %v880, %v658
        %v882 = vmul.f32 %v879, %v659
        %883 = vrot.lane.b32.xlu0 %v871, 16
        %v884 = vpop.permute.xlu0 %883
        %885 = vrot.lane.b32.xlu0 %v872, 16
        %v886 = vpop.permute.xlu0 %885
        %v887 = vsel %vm671, %v884, %v886
        %v888 = vsel %vm671, %v886, %v884
        %v889 = vmul.f32 %v888, %v674
        %v890 = vmul.f32 %v887, %v675
        %891 = vrot.lane.b32.xlu0 %v871, 15
        %v892 = vpop.permute.xlu0 %891
        %893 = vrot.lane.b32.xlu0 %v872, 15
        %v894 = vpop.permute.xlu0 %893
        %v895 = vsel %vm687, %v892, %v894
        %v896 = vsel %vm687, %v894, %v892
        %v897 = vmul.f32 %v896, %v690
        %v898 = vmul.f32 %v895, %v691
        %899 = vrot.lane.b32.xlu0 %v871, 1
        %v900 = vpop.permute.xlu0 %899
        %901 = vrot.lane.b32.xlu0 %v872, 1
        %v902 = vpop.permute.xlu0 %901
        %v903 = vsel %vm703, %v900, %v902
        %v904 = vsel %vm703, %v902, %v900
        %v905 = vmul.f32 %v904, %v706
        %v906 = vmul.f32 %v903, %v707
        %907 = vrot.lane.b32.xlu0 %v871, 127
        %v908 = vpop.permute.xlu0 %907
        %909 = vrot.lane.b32.xlu0 %v872, 127
        %v910 = vpop.permute.xlu0 %909
        %v911 = vsel %vm719, %v908, %v910
        %v912 = vsel %vm719, %v910, %v908
        %v913 = vmul.f32 %v911, %v722
        %v914 = vmul.f32 %v912, %v723
        %915 = vrot.lane.b32.xlu0 %v871, 113
        %v916 = vpop.permute.xlu0 %915
        %917 = vrot.lane.b32.xlu0 %v872, 113
        %v918 = vpop.permute.xlu0 %917
        %v919 = vsel %vm735, %v916, %v918
        %v920 = vsel %vm735, %v918, %v916
        %v921 = vmul.f32 %v919, %v738
        %v922 = vmul.f32 %v920, %v739
        %923 = vrot.lane.b32.xlu0 %v871, 112
        %v924 = vpop.permute.xlu0 %923
        %925 = vrot.lane.b32.xlu0 %v872, 112
        %v926 = vpop.permute.xlu0 %925
        %v927 = vsel %vm751, %v924, %v926
        %v928 = vsel %vm751, %v926, %v924
        %v929 = vmul.f32 %v927, %v754
        %v930 = vmul.f32 %v928, %v755
        %931 = vrot.lane.b32.xlu0 %v871, 111
        %v932 = vpop.permute.xlu0 %931
        %933 = vrot.lane.b32.xlu0 %v872, 111
        %v934 = vpop.permute.xlu0 %933
        %v935 = vsel %vm767, %v932, %v934
        %v936 = vsel %vm767, %v934, %v932
        %v937 = vmul.f32 %v935, %v770
        %v938 = vmul.f32 %v936, %v771
        %v941 = vrot.slane %v889, 4
        %v942 = vrot.slane %v890, 4
        %v947 = vrot.slane %v905, 4
        %v948 = vrot.slane %v906, 4
        %v953 = vrot.slane %v913, 4
        %v954 = vrot.slane %v914, 4
        %v959 = vrot.slane %v929, 4
        %v960 = vrot.slane %v930, 4
        %v963 = vsel %vm803, %v881, %v941
        %v964 = vsel %vm803, %v882, %v942
        %v965 = vsel %vm803, %v897, %v947
        %v966 = vsel %vm803, %v898, %v948
        %v967 = vsel %vm803, %v871, %v953
        %v968 = vsel %vm803, %v872, %v954
        %v969 = vsel %vm803, %v921, %v959
        %v970 = vsel %vm803, %v922, %v960
        %972 = vset.pattern.permute.xlu0 0
        %973 = vperm.xlu0 %972, %v874
        %v974 = vpop.permute.xlu0 %973
        %v977 = vsel %vm817, %v873, 0
        %v980 = vsel %vm803, %v937, 0
        %v983 = vsel %vm803, %v938, 0
        %985 = vmatpush.msra.mxu0 0.0
        %986 = vmatpush.msra.mxu0 0.0
        %987 = vmatpush.msra.mxu0 0.0
        %988 = vmatpush.msra.mxu0 0.0
        %989 = vmatpush.msra.mxu0 0.0
        %990 = vmatpush.msra.mxu0 0.0
        %991 = vmatpush.msra.mxu0 0.0
        %992 = vmatpush.msra.mxu0 0.0
        %993 = vmatpush.msra.mxu0 0.0
        %994 = vmatpush.msra.mxu0 0.0
        %995 = vmatpush.msra.mxu0 0.0
        %996 = vmatpush.msra.mxu0 %v980
        %997 = vmatpush.msra.mxu0 %v969
        %998 = vmatpush.msra.mxu0 %v967
        %999 = vmatpush.msra.mxu0 %v965
        %1000 = vmatpush.msra.mxu0 %v963
        %1001 = vmatmul.f32.gmra.mxu0 %v977
        %v1002 = vpop.f32.mrf.mxu0
        %v1003 = vadd.f32 %v974, %v1002
        %1004 = vdwg.mxu0
        %1005 = vmatpush.msra.mxu0 0.0
        %1006 = vmatpush.msra.mxu0 0.0
        %1007 = vmatpush.msra.mxu0 0.0
        %1008 = vmatpush.msra.mxu0 0.0
        %1009 = vmatpush.msra.mxu0 0.0
        %1010 = vmatpush.msra.mxu0 0.0
        %1011 = vmatpush.msra.mxu0 0.0
        %1012 = vmatpush.msra.mxu0 0.0
        %1013 = vmatpush.msra.mxu0 0.0
        %1014 = vmatpush.msra.mxu0 0.0
        %1015 = vmatpush.msra.mxu0 0.0
        %1016 = vmatpush.msra.mxu0 %v983
        %1017 = vmatpush.msra.mxu0 %v970
        %1018 = vmatpush.msra.mxu0 %v968
        %1019 = vmatpush.msra.mxu0 %v966
        %1020 = vmatpush.msra.mxu0 %v964
        %1021 = vmatmul.f32.gmra.mxu0 %v977
        %v1022 = vpop.f32.mrf.mxu0
        %v1023 = vadd.f32 %v974, %v1022
        %1024 = vdwg.mxu0
        %v1025 = vld [vmem:[%s8] sm:$0xf]
        %v1026 = vld [vmem:[%s9] sm:$0xf]
        %1028 = vst [vmem:[#allocation1] ss:$2 sm:$0xff] %v639
        %v1029 = vld.sshfl [vmem:[#allocation1] sm:$0xff pattern:$0x75316420]
        %v1030 = vld.sshfl [vmem:[#allocation1 + $0x8] sm:$0xff pattern:$0x75316420]
        %1033 = vrot.lane.b32.xlu0 %v1029, 17
        %v1034 = vpop.permute.xlu0 %1033
        %1035 = vrot.lane.b32.xlu0 %v1030, 17
        %v1036 = vpop.permute.xlu0 %1035
        %v1037 = vsel %vm655, %v1034, %v1036
        %v1038 = vsel %vm655, %v1036, %v1034
        %v1039 = vmul.f32 %v1038, %v658
        %v1040 = vmul.f32 %v1037, %v659
        %1041 = vst [vmem:[#allocation1] ss:$2 sm:$0xff] %v639
        %v1042 = vld.sshfl [vmem:[#allocation1] sm:$0xff pattern:$0x75316420]
        %v1043 = vld.sshfl [vmem:[#allocation1 + $0x8] sm:$0xff pattern:$0x75316420]
        %1046 = vrot.lane.b32.xlu0 %v1042, 16
        %v1047 = vpop.permute.xlu0 %1046
        %1048 = vrot.lane.b32.xlu0 %v1043, 16
        %v1049 = vpop.permute.xlu0 %1048
        %v1050 = vsel %vm671, %v1047, %v1049
        %v1051 = vsel %vm671, %v1049, %v1047
        %v1052 = vmul.f32 %v1051, %v674
        %v1053 = vmul.f32 %v1050, %v675
        %1054 = vst [vmem:[#allocation1] ss:$2 sm:$0xff] %v639
        %v1055 = vld.sshfl [vmem:[#allocation1] sm:$0xff pattern:$0x75316420]
        %v1056 = vld.sshfl [vmem:[#allocation1 + $0x8] sm:$0xff pattern:$0x75316420]
        %1059 = vrot.lane.b32.xlu0 %v1055, 15
        %v1060 = vpop.permute.xlu0 %1059
        %1061 = vrot.lane.b32.xlu0 %v1056, 15
        %v1062 = vpop.permute.xlu0 %1061
        %v1063 = vsel %vm687, %v1060, %v1062
        %v1064 = vsel %vm687, %v1062, %v1060
        %v1065 = vmul.f32 %v1064, %v690
        %v1066 = vmul.f32 %v1063, %v691
        %1067 = vst [vmem:[#allocation1] ss:$2 sm:$0xff] %v639
        %v1068 = vld.sshfl [vmem:[#allocation1] sm:$0xff pattern:$0x75316420]
        %v1069 = vld.sshfl [vmem:[#allocation1 + $0x8] sm:$0xff pattern:$0x75316420]
        %1072 = vrot.lane.b32.xlu0 %v1068, 1
        %v1073 = vpop.permute.xlu0 %1072
        %1074 = vrot.lane.b32.xlu0 %v1069, 1
        %v1075 = vpop.permute.xlu0 %1074
        %v1076 = vsel %vm703, %v1073, %v1075
        %v1077 = vsel %vm703, %v1075, %v1073
        %v1078 = vmul.f32 %v1077, %v706
        %v1079 = vmul.f32 %v1076, %v707
        %1080 = vst [vmem:[#allocation1] ss:$2 sm:$0xff] %v639
        %v1081 = vld.sshfl [vmem:[#allocation1] sm:$0xff pattern:$0x75316420]
        %v1082 = vld.sshfl [vmem:[#allocation1 + $0x8] sm:$0xff pattern:$0x75316420]
        %1085 = vrot.lane.b32.xlu0 %v1081, 127
        %v1086 = vpop.permute.xlu0 %1085
        %1087 = vrot.lane.b32.xlu0 %v1082, 127
        %v1088 = vpop.permute.xlu0 %1087
        %v1089 = vsel %vm719, %v1086, %v1088
        %v1090 = vsel %vm719, %v1088, %v1086
        %v1091 = vmul.f32 %v1089, %v722
        %v1092 = vmul.f32 %v1090, %v723
        %1093 = vst [vmem:[#allocation1] ss:$2 sm:$0xff] %v639
        %v1094 = vld.sshfl [vmem:[#allocation1] sm:$0xff pattern:$0x75316420]
        %v1095 = vld.sshfl [vmem:[#allocation1 + $0x8] sm:$0xff pattern:$0x75316420]
        %1098 = vrot.lane.b32.xlu0 %v1094, 113
        %v1099 = vpop.permute.xlu0 %1098
        %1100 = vrot.lane.b32.xlu0 %v1095, 113
        %v1101 = vpop.permute.xlu0 %1100
        %v1102 = vsel %vm735, %v1099, %v1101
        %v1103 = vsel %vm735, %v1101, %v1099
        %v1104 = vmul.f32 %v1102, %v738
        %v1105 = vmul.f32 %v1103, %v739
        %1106 = vst [vmem:[#allocation1] ss:$2 sm:$0xff] %v639
        %v1107 = vld.sshfl [vmem:[#allocation1] sm:$0xff pattern:$0x75316420]
        %v1108 = vld.sshfl [vmem:[#allocation1 + $0x8] sm:$0xff pattern:$0x75316420]
        %1111 = vrot.lane.b32.xlu0 %v1107, 112
        %v1112 = vpop.permute.xlu0 %1111
        %1113 = vrot.lane.b32.xlu0 %v1108, 112
        %v1114 = vpop.permute.xlu0 %1113
        %v1115 = vsel %vm751, %v1112, %v1114
        %v1116 = vsel %vm751, %v1114, %v1112
        %v1117 = vmul.f32 %v1115, %v754
        %v1118 = vmul.f32 %v1116, %v755
        %1119 = vst [vmem:[#allocation1] ss:$2 sm:$0xff] %v639
        %v1120 = vld.sshfl [vmem:[#allocation1] sm:$0xff pattern:$0x75316420]
        %v1121 = vld.sshfl [vmem:[#allocation1 + $0x8] sm:$0xff pattern:$0x75316420]
        %1124 = vrot.lane.b32.xlu0 %v1120, 111
        %v1125 = vpop.permute.xlu0 %1124
        %1126 = vrot.lane.b32.xlu0 %v1121, 111
        %v1127 = vpop.permute.xlu0 %1126
        %v1128 = vsel %vm767, %v1125, %v1127
        %v1129 = vsel %vm767, %v1127, %v1125
        %v1130 = vmul.f32 %v1128, %v770
        %v1131 = vmul.f32 %v1129, %v771
        %v1134 = vrot.slane %v1052, 4
        %v1135 = vrot.slane %v1053, 4
        %v1140 = vrot.slane %v1078, 4
        %v1141 = vrot.slane %v1079, 4
        %1144 = vst [vmem:[#allocation1] ss:$2 sm:$0xff] %v639
        %v1145 = vld.sshfl [vmem:[#allocation1] sm:$0xff pattern:$0x75316420]
        %v1146 = vld.sshfl [vmem:[#allocation1 + $0x8] sm:$0xff pattern:$0x75316420]
        %v1151 = vrot.slane %v1091, 4
        %v1152 = vrot.slane %v1092, 4
        %v1157 = vrot.slane %v1117, 4
        %v1158 = vrot.slane %v1118, 4
        %v1161 = vsel %vm803, %v1039, %v1134
        %v1162 = vsel %vm803, %v1040, %v1135
        %v1163 = vsel %vm803, %v1065, %v1140
        %v1164 = vsel %vm803, %v1066, %v1141
        %v1165 = vsel %vm803, %v1145, %v1151
        %v1166 = vsel %vm803, %v1146, %v1152
        %v1167 = vsel %vm803, %v1104, %v1157
        %v1168 = vsel %vm803, %v1105, %v1158
        %1170 = vset.pattern.permute.xlu0 0
        %1171 = vperm.xlu0 %1170, %v1026
        %v1172 = vpop.permute.xlu0 %1171
        %v1175 = vsel %vm817, %v1025, 0
        %v1178 = vsel %vm803, %v1130, 0
        %v1181 = vsel %vm803, %v1131, 0
        %1183 = vmatpush.msra.mxu0 0.0
        %1184 = vmatpush.msra.mxu0 0.0
        %1185 = vmatpush.msra.mxu0 0.0
        %1186 = vmatpush.msra.mxu0 0.0
        %1187 = vmatpush.msra.mxu0 0.0
        %1188 = vmatpush.msra.mxu0 0.0
        %1189 = vmatpush.msra.mxu0 0.0
        %1190 = vmatpush.msra.mxu0 0.0
        %1191 = vmatpush.msra.mxu0 0.0
        %1192 = vmatpush.msra.mxu0 0.0
        %1193 = vmatpush.msra.mxu0 0.0
        %1194 = vmatpush.msra.mxu0 %v1178
        %1195 = vmatpush.msra.mxu0 %v1167
        %1196 = vmatpush.msra.mxu0 %v1165
        %1197 = vmatpush.msra.mxu0 %v1163
        %1198 = vmatpush.msra.mxu0 %v1161
        %1199 = vmatmul.f32.gmra.mxu0 %v1175
        %v1200 = vpop.f32.mrf.mxu0
        %v1201 = vadd.f32 %v1172, %v1200
        %1202 = vdwg.mxu0
        %1203 = vmatpush.msra.mxu0 0.0
        %1204 = vmatpush.msra.mxu0 0.0
        %1205 = vmatpush.msra.mxu0 0.0
        %1206 = vmatpush.msra.mxu0 0.0
        %1207 = vmatpush.msra.mxu0 0.0
        %1208 = vmatpush.msra.mxu0 0.0
        %1209 = vmatpush.msra.mxu0 0.0
        %1210 = vmatpush.msra.mxu0 0.0
        %1211 = vmatpush.msra.mxu0 0.0
        %1212 = vmatpush.msra.mxu0 0.0
        %1213 = vmatpush.msra.mxu0 0.0
        %1214 = vmatpush.msra.mxu0 %v1181
        %1215 = vmatpush.msra.mxu0 %v1168
        %1216 = vmatpush.msra.mxu0 %v1166
        %1217 = vmatpush.msra.mxu0 %v1164
        %1218 = vmatpush.msra.mxu0 %v1162
        %1219 = vmatmul.f32.gmra.mxu0 %v1175
        %v1220 = vpop.f32.mrf.mxu0
        %v1221 = vadd.f32 %v1172, %v1220
        %1222 = vdwg.mxu0
        %vm1223 = vcmp.gt.f32.partialorder %v1201, 0.0
        %vm1224 = vcmp.gt.f32.partialorder %v1221, 0.0
        %v1225 = vmul.f32 %v1201, 0.2
        %v1226 = vmul.f32 %v1221, 0.2
        %v1227 = vsel %vm1223, %v1201, %v1225
        %v1228 = vsel %vm1224, %v1221, %v1226
        %v1229 = vld [vmem:[%s10] sm:$0xf]
        %v1230 = vld [vmem:[%s11] sm:$0xf]
        %1231 = vrot.lane.b32.xlu0 %v1227, 17
        %v1232 = vpop.permute.xlu0 %1231
        %1233 = vrot.lane.b32.xlu0 %v1228, 17
        %v1234 = vpop.permute.xlu0 %1233
        %v1235 = vsel %vm655, %v1232, %v1234
        %v1236 = vsel %vm655, %v1234, %v1232
        %v1237 = vmul.f32 %v1236, %v658
        %v1238 = vmul.f32 %v1235, %v659
        %1239 = vrot.lane.b32.xlu0 %v1227, 16
        %v1240 = vpop.permute.xlu0 %1239
        %1241 = vrot.lane.b32.xlu0 %v1228, 16
        %v1242 = vpop.permute.xlu0 %1241
        %v1243 = vsel %vm671, %v1240, %v1242
        %v1244 = vsel %vm671, %v1242, %v1240
        %v1245 = vmul.f32 %v1244, %v674
        %v1246 = vmul.f32 %v1243, %v675
        %1247 = vrot.lane.b32.xlu0 %v1227, 15
        %v1248 = vpop.permute.xlu0 %1247
        %1249 = vrot.lane.b32.xlu0 %v1228, 15
        %v1250 = vpop.permute.xlu0 %1249
        %v1251 = vsel %vm687, %v1248, %v1250
        %v1252 = vsel %vm687, %v1250, %v1248
        %v1253 = vmul.f32 %v1252, %v690
        %v1254 = vmul.f32 %v1251, %v691
        %1255 = vrot.lane.b32.xlu0 %v1227, 1
        %v1256 = vpop.permute.xlu0 %1255
        %1257 = vrot.lane.b32.xlu0 %v1228, 1
        %v1258 = vpop.permute.xlu0 %1257
        %v1259 = vsel %vm703, %v1256, %v1258
        %v1260 = vsel %vm703, %v1258, %v1256
        %v1261 = vmul.f32 %v1260, %v706
        %v1262 = vmul.f32 %v1259, %v707
        %1263 = vrot.lane.b32.xlu0 %v1227, 127
        %v1264 = vpop.permute.xlu0 %1263
        %1265 = vrot.lane.b32.xlu0 %v1228, 127
        %v1266 = vpop.permute.xlu0 %1265
        %v1267 = vsel %vm719, %v1264, %v1266
        %v1268 = vsel %vm719, %v1266, %v1264
        %v1269 = vmul.f32 %v1267, %v722
        %v1270 = vmul.f32 %v1268, %v723
        %1271 = vrot.lane.b32.xlu0 %v1227, 113
        %v1272 = vpop.permute.xlu0 %1271
        %1273 = vrot.lane.b32.xlu0 %v1228, 113
        %v1274 = vpop.permute.xlu0 %1273
        %v1275 = vsel %vm735, %v1272, %v1274
        %v1276 = vsel %vm735, %v1274, %v1272
        %v1277 = vmul.f32 %v1275, %v738
        %v1278 = vmul.f32 %v1276, %v739
        %1279 = vrot.lane.b32.xlu0 %v1227, 112
        %v1280 = vpop.permute.xlu0 %1279
        %1281 = vrot.lane.b32.xlu0 %v1228, 112
        %v1282 = vpop.permute.xlu0 %1281
        %v1283 = vsel %vm751, %v1280, %v1282
        %v1284 = vsel %vm751, %v1282, %v1280
        %v1285 = vmul.f32 %v1283, %v754
        %v1286 = vmul.f32 %v1284, %v755
        %1287 = vrot.lane.b32.xlu0 %v1227, 111
        %v1288 = vpop.permute.xlu0 %1287
        %1289 = vrot.lane.b32.xlu0 %v1228, 111
        %v1290 = vpop.permute.xlu0 %1289
        %v1291 = vsel %vm767, %v1288, %v1290
        %v1292 = vsel %vm767, %v1290, %v1288
        %v1293 = vmul.f32 %v1291, %v770
        %v1294 = vmul.f32 %v1292, %v771
        %v1297 = vrot.slane %v1245, 4
        %v1298 = vrot.slane %v1246, 4
        %v1303 = vrot.slane %v1261, 4
        %v1304 = vrot.slane %v1262, 4
        %v1309 = vrot.slane %v1269, 4
        %v1310 = vrot.slane %v1270, 4
        %v1315 = vrot.slane %v1285, 4
        %v1316 = vrot.slane %v1286, 4
        %v1319 = vsel %vm803, %v1237, %v1297
        %v1320 = vsel %vm803, %v1238, %v1298
        %v1321 = vsel %vm803, %v1253, %v1303
        %v1322 = vsel %vm803, %v1254, %v1304
        %v1323 = vsel %vm803, %v1227, %v1309
        %v1324 = vsel %vm803, %v1228, %v1310
        %v1325 = vsel %vm803, %v1277, %v1315
        %v1326 = vsel %vm803, %v1278, %v1316
        %1328 = vset.pattern.permute.xlu0 0
        %1329 = vperm.xlu0 %1328, %v1230
        %v1330 = vpop.permute.xlu0 %1329
        %v1333 = vsel %vm817, %v1229, 0
        %v1336 = vsel %vm803, %v1293, 0
        %v1339 = vsel %vm803, %v1294, 0
        %1341 = vmatpush.msra.mxu0 0.0
        %1342 = vmatpush.msra.mxu0 0.0
        %1343 = vmatpush.msra.mxu0 0.0
        %1344 = vmatpush.msra.mxu0 0.0
        %1345 = vmatpush.msra.mxu0 0.0
        %1346 = vmatpush.msra.mxu0 0.0
        %1347 = vmatpush.msra.mxu0 0.0
        %1348 = vmatpush.msra.mxu0 0.0
        %1349 = vmatpush.msra.mxu0 0.0
        %1350 = vmatpush.msra.mxu0 0.0
        %1351 = vmatpush.msra.mxu0 0.0
        %1352 = vmatpush.msra.mxu0 %v1336
        %1353 = vmatpush.msra.mxu0 %v1325
        %1354 = vmatpush.msra.mxu0 %v1323
        %1355 = vmatpush.msra.mxu0 %v1321
        %1356 = vmatpush.msra.mxu0 %v1319
        %1357 = vmatmul.f32.gmra.mxu0 %v1333
        %v1358 = vpop.f32.mrf.mxu0
        %v1359 = vadd.f32 %v1330, %v1358
        %1360 = vdwg.mxu0
        %1361 = vmatpush.msra.mxu0 0.0
        %1362 = vmatpush.msra.mxu0 0.0
        %1363 = vmatpush.msra.mxu0 0.0
        %1364 = vmatpush.msra.mxu0 0.0
        %1365 = vmatpush.msra.mxu0 0.0
        %1366 = vmatpush.msra.mxu0 0.0
        %1367 = vmatpush.msra.mxu0 0.0
        %1368 = vmatpush.msra.mxu0 0.0
        %1369 = vmatpush.msra.mxu0 0.0
        %1370 = vmatpush.msra.mxu0 0.0
        %1371 = vmatpush.msra.mxu0 0.0
        %1372 = vmatpush.msra.mxu0 %v1339
        %1373 = vmatpush.msra.mxu0 %v1326
        %1374 = vmatpush.msra.mxu0 %v1324
        %1375 = vmatpush.msra.mxu0 %v1322
        %1376 = vmatpush.msra.mxu0 %v1320
        %1377 = vmatmul.f32.gmra.mxu0 %v1333
        %v1378 = vpop.f32.mrf.mxu0
        %v1379 = vadd.f32 %v1330, %v1378
        %1380 = vdwg.mxu0
        %1382 = vst [vmem:[#allocation1] ss:$2 sm:$0xff] %v640
        %v1383 = vld.sshfl [vmem:[#allocation1] sm:$0xff pattern:$0x75316420]
        %v1384 = vld.sshfl [vmem:[#allocation1 + $0x8] sm:$0xff pattern:$0x75316420]
        %v1389 = vrot.slane %v1003, 4
        %v1390 = vrot.slane %v1023, 4
        %v1393 = vsel %vm803, %v1383, %v1389
        %v1394 = vsel %vm803, %v1384, %v1390
        %v1395 = vld [vmem:[%s12] sm:$0x3f]
        %v1396 = vld [vmem:[%s13] sm:$0x3f]
        %1398 = vset.pattern.permute.xlu0 0
        %1399 = vperm.xlu0 %1398, %v1396
        %v1400 = vpop.permute.xlu0 %1399
        %vm1402 = vcmask 97280
        %v1404 = vsel %vm1402, %v1395, 0
        %v1407 = vsel %vm803, %v1359, 0
        %v1410 = vsel %vm803, %v1379, 0
        %1412 = vmatpush.msra.mxu0 0.0
        %1413 = vmatpush.msra.mxu0 0.0
        %1414 = vmatpush.msra.mxu0 0.0
        %1415 = vmatpush.msra.mxu0 0.0
        %1416 = vmatpush.msra.mxu0 0.0
        %1417 = vmatpush.msra.mxu0 0.0
        %1418 = vmatpush.msra.mxu0 0.0
        %1419 = vmatpush.msra.mxu0 0.0
        %1420 = vmatpush.msra.mxu0 0.0
        %1421 = vmatpush.msra.mxu0 0.0
        %1422 = vmatpush.msra.mxu0 0.0
        %1423 = vmatpush.msra.mxu0 0.0
        %1424 = vmatpush.msra.mxu0 0.0
        %1425 = vmatpush.msra.mxu0 0.0
        %1426 = vmatpush.msra.mxu0 %v1407
        %1427 = vmatpush.msra.mxu0 %v1393
        %1428 = vmatmul.f32.gmra.mxu0 %v1404
        %v1429 = vpop.f32.mrf.mxu0
        %v1430 = vadd.f32 %v1400, %v1429
        %1431 = vdwg.mxu0
        %1432 = vmatpush.msra.mxu0 0.0
        %1433 = vmatpush.msra.mxu0 0.0
        %1434 = vmatpush.msra.mxu0 0.0
        %1435 = vmatpush.msra.mxu0 0.0
        %1436 = vmatpush.msra.mxu0 0.0
        %1437 = vmatpush.msra.mxu0 0.0
        %1438 = vmatpush.msra.mxu0 0.0
        %1439 = vmatpush.msra.mxu0 0.0
        %1440 = vmatpush.msra.mxu0 0.0
        %1441 = vmatpush.msra.mxu0 0.0
        %1442 = vmatpush.msra.mxu0 0.0
        %1443 = vmatpush.msra.mxu0 0.0
        %1444 = vmatpush.msra.mxu0 0.0
        %1445 = vmatpush.msra.mxu0 0.0
        %1446 = vmatpush.msra.mxu0 %v1410
        %1447 = vmatpush.msra.mxu0 %v1394
        %1448 = vmatmul.f32.gmra.mxu0 %v1404
        %v1449 = vpop.f32.mrf.mxu0
        %v1450 = vadd.f32 %v1400, %v1449
        %1451 = vdwg.mxu0
        %v1452 = vld [vmem:[%s14] sm:$0xf]
        %1453 = vrot.lane.b32.xlu0 %v1430, 17
        %v1454 = vpop.permute.xlu0 %1453
        %1455 = vrot.lane.b32.xlu0 %v1450, 17
        %v1456 = vpop.permute.xlu0 %1455
        %v1457 = vsel %vm655, %v1454, %v1456
        %v1458 = vsel %vm655, %v1456, %v1454
        %v1459 = vmul.f32 %v1458, %v658
        %v1460 = vmul.f32 %v1457, %v659
        %1461 = vrot.lane.b32.xlu0 %v1430, 16
        %v1462 = vpop.permute.xlu0 %1461
        %1463 = vrot.lane.b32.xlu0 %v1450, 16
        %v1464 = vpop.permute.xlu0 %1463
        %v1465 = vsel %vm671, %v1462, %v1464
        %v1466 = vsel %vm671, %v1464, %v1462
        %v1467 = vmul.f32 %v1466, %v674
        %v1468 = vmul.f32 %v1465, %v675
        %1469 = vrot.lane.b32.xlu0 %v1430, 15
        %v1470 = vpop.permute.xlu0 %1469
        %1471 = vrot.lane.b32.xlu0 %v1450, 15
        %v1472 = vpop.permute.xlu0 %1471
        %v1473 = vsel %vm687, %v1470, %v1472
        %v1474 = vsel %vm687, %v1472, %v1470
        %v1475 = vmul.f32 %v1474, %v690
        %v1476 = vmul.f32 %v1473, %v691
        %1477 = vrot.lane.b32.xlu0 %v1430, 1
        %v1478 = vpop.permute.xlu0 %1477
        %1479 = vrot.lane.b32.xlu0 %v1450, 1
        %v1480 = vpop.permute.xlu0 %1479
        %v1481 = vsel %vm703, %v1478, %v1480
        %v1482 = vsel %vm703, %v1480, %v1478
        %v1483 = vmul.f32 %v1482, %v706
        %v1484 = vmul.f32 %v1481, %v707
        %1485 = vrot.lane.b32.xlu0 %v1430, 127
        %v1486 = vpop.permute.xlu0 %1485
        %1487 = vrot.lane.b32.xlu0 %v1450, 127
        %v1488 = vpop.permute.xlu0 %1487
        %v1489 = vsel %vm719, %v1486, %v1488
        %v1490 = vsel %vm719, %v1488, %v1486
        %v1491 = vmul.f32 %v1489, %v722
        %v1492 = vmul.f32 %v1490, %v723
        %1493 = vrot.lane.b32.xlu0 %v1430, 113
        %v1494 = vpop.permute.xlu0 %1493
        %1495 = vrot.lane.b32.xlu0 %v1450, 113
        %v1496 = vpop.permute.xlu0 %1495
        %v1497 = vsel %vm735, %v1494, %v1496
        %v1498 = vsel %vm735, %v1496, %v1494
        %v1499 = vmul.f32 %v1497, %v738
        %v1500 = vmul.f32 %v1498, %v739
        %1501 = vrot.lane.b32.xlu0 %v1430, 112
        %v1502 = vpop.permute.xlu0 %1501
        %1503 = vrot.lane.b32.xlu0 %v1450, 112
        %v1504 = vpop.permute.xlu0 %1503
        %v1505 = vsel %vm751, %v1502, %v1504
        %v1506 = vsel %vm751, %v1504, %v1502
        %v1507 = vmul.f32 %v1505, %v754
        %v1508 = vmul.f32 %v1506, %v755
        %1509 = vrot.lane.b32.xlu0 %v1430, 111
        %v1510 = vpop.permute.xlu0 %1509
        %1511 = vrot.lane.b32.xlu0 %v1450, 111
        %v1512 = vpop.permute.xlu0 %1511
        %v1513 = vsel %vm767, %v1510, %v1512
        %v1514 = vsel %vm767, %v1512, %v1510
        %v1515 = vmul.f32 %v1513, %v770
        %v1516 = vmul.f32 %v1514, %v771
        %v1519 = vrot.slane %v1467, 2
        %v1520 = vrot.slane %v1468, 2
        %v1525 = vrot.slane %v1475, 4
        %v1526 = vrot.slane %v1476, 4
        %v1531 = vrot.slane %v1483, 6
        %v1532 = vrot.slane %v1484, 6
        %v1537 = vrot.slane %v1491, 2
        %v1538 = vrot.slane %v1492, 2
        %v1543 = vrot.slane %v1499, 4
        %v1544 = vrot.slane %v1500, 4
        %v1549 = vrot.slane %v1507, 6
        %v1550 = vrot.slane %v1508, 6
        %vm1553 = vcmask 1045504
        %v1554 = vsel %vm1553, %v1459, %v1519
        %v1555 = vsel %vm1553, %v1460, %v1520
        %v1556 = vsel %vm803, %v1519, %v1525
        %v1557 = vsel %vm803, %v1520, %v1526
        %vm1558 = vcmask 1041408
        %v1559 = vsel %vm1558, %v1525, %v1531
        %v1560 = vsel %vm1558, %v1526, %v1532
        %v1561 = vsel %vm1553, %v1430, %v1537
        %v1562 = vsel %vm1553, %v1450, %v1538
        %v1563 = vsel %vm803, %v1537, %v1543
        %v1564 = vsel %vm803, %v1538, %v1544
        %v1565 = vsel %vm1558, %v1543, %v1549
        %v1566 = vsel %vm1558, %v1544, %v1550
        %vm1567 = vcmask 441344
        %v1569 = vsel %vm1567, %v1452, 0
        %v1572 = vsel %vm1553, %v1515, 0
        %v1575 = vsel %vm1553, %v1516, 0
        %1577 = vmatpush.msra.mxu0 0.0
        %1578 = vmatpush.msra.mxu0 0.0
        %1579 = vmatpush.msra.mxu0 0.0
        %1580 = vmatpush.msra.mxu0 0.0
        %1581 = vmatpush.msra.mxu0 0.0
        %1582 = vmatpush.msra.mxu0 0.0
        %1583 = vmatpush.msra.mxu0 0.0
        %1584 = vmatpush.msra.mxu0 0.0
        %1585 = vmatpush.msra.mxu0 0.0
        %1586 = vmatpush.msra.mxu0 %v1572
        %1587 = vmatpush.msra.mxu0 %v1565
        %1588 = vmatpush.msra.mxu0 %v1563
        %1589 = vmatpush.msra.mxu0 %v1561
        %1590 = vmatpush.msra.mxu0 %v1559
        %1591 = vmatpush.msra.mxu0 %v1556
        %1592 = vmatpush.msra.mxu0 %v1554
        %1593 = vmatmul.f32.gmra.mxu0 %v1569
        %v1594 = vpop.f32.mrf.mxu0
        %v1595 = vadd.f32 0.0, %v1594
        %1596 = vdwg.mxu0
        %1597 = vmatpush.msra.mxu0 0.0
        %1598 = vmatpush.msra.mxu0 0.0
        %1599 = vmatpush.msra.mxu0 0.0
        %1600 = vmatpush.msra.mxu0 0.0
        %1601 = vmatpush.msra.mxu0 0.0
        %1602 = vmatpush.msra.mxu0 0.0
        %1603 = vmatpush.msra.mxu0 0.0
        %1604 = vmatpush.msra.mxu0 0.0
        %1605 = vmatpush.msra.mxu0 0.0
        %1606 = vmatpush.msra.mxu0 %v1575
        %1607 = vmatpush.msra.mxu0 %v1566
        %1608 = vmatpush.msra.mxu0 %v1564
        %1609 = vmatpush.msra.mxu0 %v1562
        %1610 = vmatpush.msra.mxu0 %v1560
        %1611 = vmatpush.msra.mxu0 %v1557
        %1612 = vmatpush.msra.mxu0 %v1555
        %1613 = vmatmul.f32.gmra.mxu0 %v1569
        %v1614 = vpop.f32.mrf.mxu0
        %v1615 = vadd.f32 0.0, %v1614
        %1616 = vdwg.mxu0
        %vm1617 = vcmp.gt.f32.partialorder %v1595, 0.0
        %vm1618 = vcmp.gt.f32.partialorder %v1615, 0.0
        %v1619 = vmul.f32 %v1595, 0.2
        %v1620 = vmul.f32 %v1615, 0.2
        %v1621 = vsel %vm1617, %v1595, %v1619
        %v1622 = vsel %vm1618, %v1615, %v1620
        %v1623 = vld [vmem:[%s15] sm:$0xf]
        %1624 = vrot.lane.b32.xlu0 %v1621, 17
        %v1625 = vpop.permute.xlu0 %1624
        %1626 = vrot.lane.b32.xlu0 %v1622, 17
        %v1627 = vpop.permute.xlu0 %1626
        %v1628 = vsel %vm655, %v1625, %v1627
        %v1629 = vsel %vm655, %v1627, %v1625
        %v1630 = vmul.f32 %v1629, %v658
        %v1631 = vmul.f32 %v1628, %v659
        %1632 = vrot.lane.b32.xlu0 %v1621, 16
        %v1633 = vpop.permute.xlu0 %1632
        %1634 = vrot.lane.b32.xlu0 %v1622, 16
        %v1635 = vpop.permute.xlu0 %1634
        %v1636 = vsel %vm671, %v1633, %v1635
        %v1637 = vsel %vm671, %v1635, %v1633
        %v1638 = vmul.f32 %v1637, %v674
        %v1639 = vmul.f32 %v1636, %v675
        %1640 = vrot.lane.b32.xlu0 %v1621, 15
        %v1641 = vpop.permute.xlu0 %1640
        %1642 = vrot.lane.b32.xlu0 %v1622, 15
        %v1643 = vpop.permute.xlu0 %1642
        %v1644 = vsel %vm687, %v1641, %v1643
        %v1645 = vsel %vm687, %v1643, %v1641
        %v1646 = vmul.f32 %v1645, %v690
        %v1647 = vmul.f32 %v1644, %v691
        %1648 = vrot.lane.b32.xlu0 %v1621, 1
        %v1649 = vpop.permute.xlu0 %1648
        %1650 = vrot.lane.b32.xlu0 %v1622, 1
        %v1651 = vpop.permute.xlu0 %1650
        %v1652 = vsel %vm703, %v1649, %v1651
        %v1653 = vsel %vm703, %v1651, %v1649
        %v1654 = vmul.f32 %v1653, %v706
        %v1655 = vmul.f32 %v1652, %v707
        %1656 = vrot.lane.b32.xlu0 %v1621, 127
        %v1657 = vpop.permute.xlu0 %1656
        %1658 = vrot.lane.b32.xlu0 %v1622, 127
        %v1659 = vpop.permute.xlu0 %1658
        %v1660 = vsel %vm719, %v1657, %v1659
        %v1661 = vsel %vm719, %v1659, %v1657
        %v1662 = vmul.f32 %v1660, %v722
        %v1663 = vmul.f32 %v1661, %v723
        %1664 = vrot.lane.b32.xlu0 %v1621, 113
        %v1665 = vpop.permute.xlu0 %1664
        %1666 = vrot.lane.b32.xlu0 %v1622, 113
        %v1667 = vpop.permute.xlu0 %1666
        %v1668 = vsel %vm735, %v1665, %v1667
        %v1669 = vsel %vm735, %v1667, %v1665
        %v1670 = vmul.f32 %v1668, %v738
        %v1671 = vmul.f32 %v1669, %v739
        %1672 = vrot.lane.b32.xlu0 %v1621, 112
        %v1673 = vpop.permute.xlu0 %1672
        %1674 = vrot.lane.b32.xlu0 %v1622, 112
        %v1675 = vpop.permute.xlu0 %1674
        %v1676 = vsel %vm751, %v1673, %v1675
        %v1677 = vsel %vm751, %v1675, %v1673
        %v1678 = vmul.f32 %v1676, %v754
        %v1679 = vmul.f32 %v1677, %v755
        %1680 = vrot.lane.b32.xlu0 %v1621, 111
        %v1681 = vpop.permute.xlu0 %1680
        %1682 = vrot.lane.b32.xlu0 %v1622, 111
        %v1683 = vpop.permute.xlu0 %1682
        %v1684 = vsel %vm767, %v1681, %v1683
        %v1685 = vsel %vm767, %v1683, %v1681
        %v1686 = vmul.f32 %v1684, %v770
        %v1687 = vmul.f32 %v1685, %v771
        %v1690 = vrot.slane %v1638, 4
        %v1691 = vrot.slane %v1639, 4
        %v1696 = vrot.slane %v1654, 4
        %v1697 = vrot.slane %v1655, 4
        %v1702 = vrot.slane %v1662, 4
        %v1703 = vrot.slane %v1663, 4
        %v1708 = vrot.slane %v1678, 4
        %v1709 = vrot.slane %v1679, 4
        %v1712 = vsel %vm803, %v1630, %v1690
        %v1713 = vsel %vm803, %v1631, %v1691
        %v1714 = vsel %vm803, %v1646, %v1696
        %v1715 = vsel %vm803, %v1647, %v1697
        %v1716 = vsel %vm803, %v1621, %v1702
        %v1717 = vsel %vm803, %v1622, %v1703
        %v1718 = vsel %vm803, %v1670, %v1708
        %v1719 = vsel %vm803, %v1671, %v1709
        %v1721 = vsel %vm817, %v1623, 0
        %v1724 = vsel %vm803, %v1686, 0
        %v1727 = vsel %vm803, %v1687, 0
        %1729 = vmatpush.msra.mxu0 0.0
        %1730 = vmatpush.msra.mxu0 0.0
        %1731 = vmatpush.msra.mxu0 0.0
        %1732 = vmatpush.msra.mxu0 0.0
        %1733 = vmatpush.msra.mxu0 0.0
        %1734 = vmatpush.msra.mxu0 0.0
        %1735 = vmatpush.msra.mxu0 0.0
        %1736 = vmatpush.msra.mxu0 0.0
        %1737 = vmatpush.msra.mxu0 0.0
        %1738 = vmatpush.msra.mxu0 0.0
        %1739 = vmatpush.msra.mxu0 0.0
        %1740 = vmatpush.msra.mxu0 %v1724
        %1741 = vmatpush.msra.mxu0 %v1718
        %1742 = vmatpush.msra.mxu0 %v1716
        %1743 = vmatpush.msra.mxu0 %v1714
        %1744 = vmatpush.msra.mxu0 %v1712
        %1745 = vmatmul.f32.gmra.mxu0 %v1721
        %v1746 = vpop.f32.mrf.mxu0
        %v1747 = vadd.f32 0.0, %v1746
        %1748 = vdwg.mxu0
        %1749 = vmatpush.msra.mxu0 0.0
        %1750 = vmatpush.msra.mxu0 0.0
        %1751 = vmatpush.msra.mxu0 0.0
        %1752 = vmatpush.msra.mxu0 0.0
        %1753 = vmatpush.msra.mxu0 0.0
        %1754 = vmatpush.msra.mxu0 0.0
        %1755 = vmatpush.msra.mxu0 0.0
        %1756 = vmatpush.msra.mxu0 0.0
        %1757 = vmatpush.msra.mxu0 0.0
        %1758 = vmatpush.msra.mxu0 0.0
        %1759 = vmatpush.msra.mxu0 0.0
        %1760 = vmatpush.msra.mxu0 %v1727
        %1761 = vmatpush.msra.mxu0 %v1719
        %1762 = vmatpush.msra.mxu0 %v1717
        %1763 = vmatpush.msra.mxu0 %v1715
        %1764 = vmatpush.msra.mxu0 %v1713
        %1765 = vmatmul.f32.gmra.mxu0 %v1721
        %v1766 = vpop.f32.mrf.mxu0
        %v1767 = vadd.f32 0.0, %v1766
        %1768 = vdwg.mxu0
        %v1769 = vsub.f32 %v1359, %v1003
        %v1770 = vsub.f32 %v1379, %v1023
        %v1771 = vmul.f32 %v1769, %v1747
        %v1772 = vmul.f32 %v1770, %v1767
        %v1773 = vadd.f32 %v1003, %v1771
        %v1774 = vadd.f32 %v1023, %v1772
        %v1777 = vrot.slane %v1774, 4
        %v1778 = vsel %vm803, %v1773, %v1777
        %1780 = vst [vmem:[%s633] sm:$0xff] %v1778
        %s1781 = sand.u32 %s396, 1
        %s1782 = scalar_lea.sflag [#allocation4], %s1781
        %s1783 = sand.u32 %s396, 1
        %s1784 = smul.addr %s1783, 8
        %s1785 = scalar_lea.vmem [#allocation10], %s1784
        // Predicated region
        $region101: #{tpu_custom_call.1} parent=83 // pred_check
          %p1786 = pneg %p406
        $region102: #{tpu_custom_call.1} parent=83 // pred_check_branch
          %1788 = sbr.rel (%p1786) target = $region104
        $region103: #{tpu_custom_call.1} parent=83 // pred_region
          %1790 = vsyncadd %s1782, 0
          %s1791 = smul.addr %s37, 2
          %s1792 = smul.addr %s1791, 4
          %s1793 = scalar_lea.hbm %s16, %s1792
          %s1795 = sshll.u32 %s1785, 4
          %s1796 = int_to_ptr.vmem [resolvable:$true] %s1795
          %s1797 = sshll.u32 %s1793, 4
          %s1798 = int_to_ptr.hbm [resolvable:$true] %s1797
          %1800 = dma.vmem_to_hbm [thread:$0]  %s1796, 128, %s1798, %s1782
        $region104: #{tpu_custom_call.1} parent=83 // pred_fallthru
          _
      $region84: #{tpu_custom_call.1} parent=5 // pred_fallthru
        _
      %p1801 = scmp.le.s32.totalorder 2, %s32
      // Predicated region
      $region105: #{tpu_custom_call.1} parent=5 // pred_check
        %p1802 = pneg %p1801
      $region106: #{tpu_custom_call.1} parent=5 // pred_check_branch
        %1804 = sbr.rel (%p1802) target = $region108
      $region107: #{tpu_custom_call.1} parent=5 // pred_region
        %s1805 = ssub.s32 %s32, 2
        // Predicated region
        $region109: #{tpu_custom_call.1} parent=107 // pred_check
          %p1806 = pneg %p412
        $region110: #{tpu_custom_call.1} parent=107 // pred_check_branch
          %1808 = sbr.rel (%p1806) target = $region112
        $region111: #{tpu_custom_call.1} parent=107 // pred_region
          %s1809 = sand.u32 %s397, 1
          %s1810 = scalar_lea.sflag [#allocation4], %s1809
          %s1811 = sand.u32 %s397, 1
          %s1812 = smul.addr %s1811, 8
          %s1813 = scalar_lea.vmem [#allocation10], %s1812
          %1815 = dma.done %s1810, 128
        $region112: #{tpu_custom_call.1} parent=107 // pred_fallthru
          _
      $region108: #{tpu_custom_call.1} parent=5 // pred_fallthru
        _
    $region6: #{tpu_custom_call.1} parent=1 // loop_footer
      %s36 = sadd.s32 1, %s32
    $region7: #{tpu_custom_call.1} parent=1 // loop_footer_branch
      %31 = sbr.rel target = $region3
    $region8: #{tpu_custom_call.1} parent=1 // loop_exit
      _
    %1816 = vsyncpa [#allocation3], 1
    %s1817 = scalar_lea.sflag [#allocation3], 1
    %1818 = vsyncpa %s1817, 1
    %1819 = vsyncpa [#allocation6], 1
    %s1820 = scalar_lea.sflag [#allocation6], 1
    %1821 = vsyncpa %s1820, 1
    %1822 = vsyncpa [#allocation9], 1
    %1823 = vsyncpa [#allocation4], 1
    %s1824 = scalar_lea.sflag [#allocation4], 1
    %1825 = vsyncpa %s1824, 1

</llo_original>
